<compile_context>
chip_gen: v7x
topology: tpu7x:2x2x1
jax: 0.10.0
libtpu: 0.0.40
codegen_flags: <defaults>
</compile_context>

<pallas_src>
import functools
import math

import jax
import jax.numpy as jnp
from jax import lax
from jax.experimental import pallas as pl
from jax.experimental.pallas import tpu as pltpu

LN_EPS = 1e-5


def _layernorm_f32(v, gamma, beta):
    """LayerNorm in f32 (biased variance, matches PyTorch nn.LayerNorm)."""
    mu = jnp.mean(v, axis=-1, keepdims=True)
    var = jnp.mean((v - mu) ** 2, axis=-1, keepdims=True)
    return (v - mu) * lax.rsqrt(var + LN_EPS) * gamma + beta


def _attention(qc, kc, vc, *, batch, n_heads, kv_tile):
    """Self-attention on batch-folded (B*S, D) bf16 q/k/v (1/sqrt(Dh) folded into q).

    Returns the (B*S, D) f32 context (before the output projection).
    """
    BS, D = qc.shape
    S = BS // batch
    Dh = D // n_heads
    cdt = qc.dtype

    batch_ctx = []
    for b in range(batch):                      # static loop: small batch count
        r0 = b * S
        qb = qc[r0:r0 + S, :]
        kb = kc[r0:r0 + S, :]
        vb = vc[r0:r0 + S, :]
        head_ctx = []
        for hh in range(n_heads):               # static loop: few heads
            c0 = hh * Dh
            qh = qb[:, c0:c0 + Dh]
            kh = kb[:, c0:c0 + Dh]
            vh = vb[:, c0:c0 + Dh]

            if S <= kv_tile:
                # Single-tile case (typical ViT): plain softmax, no online
                # max/rescale chain on the critical path.
                s = lax.dot_general(qh, kh, (((1,), (1,)), ((), ())),
                                    preferred_element_type=jnp.float32)
                m = jnp.max(s, axis=-1, keepdims=True)
                p = jnp.exp(s - m)
                denom = jnp.sum(p, axis=-1, keepdims=True)
                ctx_h = jnp.dot(p.astype(cdt), vh,
                                preferred_element_type=jnp.float32)
                ctx_h = ctx_h * pl.reciprocal(denom, approx=True)
            else:
                # Large-S path: flash-style online softmax over kv blocks.
                # fori_loop keeps instruction footprint / live ranges bounded.
                nblk = S // kv_tile

                def body(j, carry):
                    m_i, l_i, acc = carry
                    kj = lax.dynamic_slice(kh, (j * kv_tile, 0), (kv_tile, Dh))
                    vj = lax.dynamic_slice(vh, (j * kv_tile, 0), (kv_tile, Dh))
                    sj = lax.dot_general(qh, kj, (((1,), (1,)), ((), ())),
                                         preferred_element_type=jnp.float32)
                    m_new = jnp.maximum(m_i, jnp.max(sj, axis=-1, keepdims=True))
                    alpha = jnp.exp(m_i - m_new)
                    pj = jnp.exp(sj - m_new)
                    l_new = alpha * l_i + jnp.sum(pj, axis=-1, keepdims=True)
                    acc_new = alpha * acc + jnp.dot(
                        pj.astype(cdt), vj, preferred_element_type=jnp.float32)
                    return m_new, l_new, acc_new

                m0 = jnp.full((S, 1), -jnp.inf, jnp.float32)
                l0 = jnp.zeros((S, 1), jnp.float32)
                a0 = jnp.zeros((S, Dh), jnp.float32)
                _, l_i, acc = lax.fori_loop(0, nblk, body, (m0, l0, a0))
                ctx_h = acc * pl.reciprocal(l_i, approx=True)

            head_ctx.append(ctx_h)
        batch_ctx.append(jnp.concatenate(head_ctx, axis=-1))
    return jnp.concatenate(batch_ctx, axis=0)


def encoder_kernel(x_ref, vec_ref, b1_ref,
                   wq_ref, wk_ref, wv_ref, wo_ref, w1_ref, w2_ref,
                   o_ref,
                   res_ref,
                   *, batch, n_heads, kv_tile, gelu_approximate):
    """One grid step == one encoder layer over the whole (B*S, D) batch."""
    l = pl.program_id(0)

    # Load the activations from HBM into the f32 residual scratch once.
    @pl.when(l == 0)
    def _():
        res_ref[...] = x_ref[...].astype(jnp.float32)

    x = res_ref[...]                                  # (B*S, D) f32

    # Packed per-layer vectors: [g1, be1, bq, bk, bv, bo, g2, be2, b2].
    vec = vec_ref[...]                                # (9, D) f32
    g1, be1 = vec[0:1, :], vec[1:2, :]
    bq, bk = vec[2:3, :], vec[3:4, :]
    bv, bo = vec[4:5, :], vec[5:6, :]
    g2, be2, b2 = vec[6:7, :], vec[7:8, :], vec[8:9, :]
    b1 = b1_ref[...]                                  # (1, d_ff) f32

    D = x.shape[-1]
    Dh = D // n_heads
    cdt = wq_ref.dtype                                # MXU compute dtype (bf16)

    # ---- Multi-head self-attention sub-layer (pre-norm + residual) ----
    h = _layernorm_f32(x, g1, be1)
    hc = h.astype(cdt)
    q = jnp.dot(hc, wq_ref[...], preferred_element_type=jnp.float32) + bq
    k = jnp.dot(hc, wk_ref[...], preferred_element_type=jnp.float32) + bk
    v = jnp.dot(hc, wv_ref[...], preferred_element_type=jnp.float32) + bv

    scale = 1.0 / math.sqrt(Dh)                       # folded into q: O(B*S*D)
    ctx = _attention((q * scale).astype(cdt), k.astype(cdt), v.astype(cdt),
                     batch=batch, n_heads=n_heads, kv_tile=kv_tile)
    attn = jnp.dot(ctx.astype(cdt), wo_ref[...],
                   preferred_element_type=jnp.float32) + bo
    x = x + attn

    # ---- Feed-forward sub-layer (pre-norm + residual) ----
    h2 = _layernorm_f32(x, g2, be2)
    ff = jnp.dot(h2.astype(cdt), w1_ref[...],
                 preferred_element_type=jnp.float32) + b1
    ff = jax.nn.gelu(ff, approximate=gelu_approximate)
    ff = jnp.dot(ff.astype(cdt), w2_ref[...],
                 preferred_element_type=jnp.float32) + b2
    x = x + ff

    res_ref[...] = x

    # Epilogue: write the in-register value (no res_ref re-read).
    @pl.when(l == pl.num_programs(0) - 1)
    def _():
        o_ref[...] = x.astype(o_ref.dtype)


def _vmem_limit_bytes():
    """Generation-aware VMEM limit: physical minus ~8 MiB headroom, <=112 MiB."""
    try:
        phys = int(pltpu.get_tpu_info().vmem_capacity_bytes)
        return int(max(min(phys - (8 << 20), 112 << 20), 32 << 20))
    except Exception:
        return 64 << 20


def encoder_forward(x, params, *, n_heads, kv_tile=512, gelu_approximate=True):
    """x: (B, S, D); params: dict of layer-stacked arrays (leading dim = n_layers)."""
    B, S, D = x.shape
    L = params["wq"].shape[0]
    d_ff = params["w1"].shape[-1]
    BS = B * S
    if D % n_heads:
        raise ValueError("d_model must be divisible by n_heads")
    if S > kv_tile and S % kv_tile:
        # TODO(synk): pad seq_len to a multiple of kv_tile for the large-S path.
        raise ValueError("seq_len must be a multiple of kv_tile when seq_len > kv_tile")

    x2 = x.reshape(BS, D)

    def wspec(r, c):
        # Per-layer parameter: select layer l, squeeze the layer dim.
        return pl.BlockSpec((pl.Squeezed(), r, c), lambda l: (l, 0, 0))

    # Activation block index is constant in l -> fetched / written back once.
    act_spec = pl.BlockSpec((BS, D), lambda l: (0, 0))

    in_specs = [
        act_spec,                                # activations (B*S, D)
        wspec(9, D),                             # packed [g1,be1,bq,bk,bv,bo,g2,be2,b2]
        wspec(1, d_ff),                          # b1
        wspec(D, D), wspec(D, D), wspec(D, D), wspec(D, D),   # wq wk wv wo
        wspec(D, d_ff), wspec(d_ff, D),                        # w1 w2
    ]

    kernel = functools.partial(
        encoder_kernel, batch=B, n_heads=n_heads, kv_tile=kv_tile,
        gelu_approximate=gelu_approximate)

    out2 = pl.pallas_call(
        kernel,
        out_shape=jax.ShapeDtypeStruct((BS, D), x.dtype),
        grid_spec=pltpu.PrefetchScalarGridSpec(
            num_scalar_prefetch=0,
            grid=(L,),                            # layer axis only: weights DMA'd once per layer
            in_specs=in_specs,
            out_specs=act_spec,
            scratch_shapes=[pltpu.VMEM((BS, D), jnp.float32)],   # residual stream
        ),
        compiler_params=pltpu.CompilerParams(
            dimension_semantics=("arbitrary",),
            vmem_limit_bytes=_vmem_limit_bytes(),
        ),
    )(x2, params["vec"], params["b1"],
      params["wq"], params["wk"], params["wv"], params["wo"],
      params["w1"], params["w2"])
    return out2.reshape(B, S, D)


def init_params(key, d_model, d_ff, n_layers, w_dtype=jnp.bfloat16):
    """Synthetic layer-stacked weights (bf16 matrices, f32 LN params / biases).

    Matrices are stored (in, out); transpose real PyTorch nn.Linear weights.
    """
    L = n_layers
    ks = jax.random.split(key, 16)
    s_d = 1.0 / math.sqrt(d_model)
    s_f = 1.0 / math.sqrt(d_ff)

    def w(k, shape, scale):
        return (jax.random.normal(k, (L,) + shape, jnp.float32) * scale).astype(w_dtype)

    def vec(k, scale, base=0.0, n=None):
        n = d_model if n is None else n
        return base + scale * jax.random.normal(k, (L, 1, n), jnp.float32)

    g1, be1 = vec(ks[6], 0.1, base=1.0), vec(ks[7], 0.1)
    bq, bk = vec(ks[8], 0.02), vec(ks[9], 0.02)
    bv, bo = vec(ks[10], 0.02), vec(ks[11], 0.02)
    g2, be2 = vec(ks[12], 0.1, base=1.0), vec(ks[13], 0.1)
    b2 = vec(ks[14], 0.02)
    packed = jnp.concatenate([g1, be1, bq, bk, bv, bo, g2, be2, b2], axis=1)  # (L, 9, D)

    return {
        "vec": packed,
        "b1": vec(ks[15], 0.02, n=d_ff),
        "wq": w(ks[0], (d_model, d_model), s_d),
        "wk": w(ks[1], (d_model, d_model), s_d),
        "wv": w(ks[2], (d_model, d_model), s_d),
        "wo": w(ks[3], (d_model, d_model), s_d),
        "w1": w(ks[4], (d_model, d_ff), s_d),
        "w2": w(ks[5], (d_ff, d_model), s_f),
    }


def encoder_reference(x, params, *, n_heads, gelu_approximate=True):
    """Pure-JAX reference mirroring the kernel's bf16-matmul / f32-accumulate math."""
    B, S, D = x.shape
    L = params["wq"].shape[0]
    Dh = D // n_heads
    cdt = params["wq"].dtype

    def ln(v, g, b):
        mu = jnp.mean(v, axis=-1, keepdims=True)
        var = jnp.mean((v - mu) ** 2, axis=-1, keepdims=True)
        return (v - mu) * lax.rsqrt(var + LN_EPS) * g + b

    def mm(a, w):
        return jnp.einsum("bsd,df->bsf", a.astype(cdt), w,
                          preferred_element_type=jnp.float32)

    z = x.astype(jnp.float32)
    for l in range(L):
        vecs = params["vec"][l]
        g1, be1, bq, bk, bv, bo, g2, be2, b2 = [vecs[i] for i in range(9)]
        b1 = params["b1"][l, 0]

        h = ln(z, g1, be1)
        q = (mm(h, params["wq"][l]) + bq) * (1.0 / math.sqrt(Dh))
        k = mm(h, params["wk"][l]) + bk
        v = mm(h, params["wv"][l]) + bv
        qh = q.reshape(B, S, n_heads, Dh).transpose(0, 2, 1, 3).astype(cdt)
        kh = k.reshape(B, S, n_heads, Dh).transpose(0, 2, 1, 3).astype(cdt)
        vh = v.reshape(B, S, n_heads, Dh).transpose(0, 2, 1, 3).astype(cdt)
        s = jnp.einsum("bhqd,bhkd->bhqk", qh, kh,
                       preferred_element_type=jnp.float32)
        p = jax.nn.softmax(s, axis=-1)
        ctx = jnp.einsum("bhqk,bhkd->bhqd", p.astype(cdt), vh,
                         preferred_element_type=jnp.float32)
        ctx = ctx.transpose(0, 2, 1, 3).reshape(B, S, D)
        z = z + mm(ctx, params["wo"][l]) + bo

        h2 = ln(z, g2, be2)
        ff = mm(h2, params["w1"][l]) + b1
        ff = jax.nn.gelu(ff, approximate=gelu_approximate)
        ff = mm(ff, params["w2"][l]) + b2
        z = z + ff
    return z.astype(x.dtype)


if __name__ == "__main__":
    # Small shapes consistent with the module's forward: (batch, seq, d_model).
    B, S, D = 2, 8, 32
    n_heads, d_ff, n_layers = 4, 64, 2

    key = jax.random.PRNGKey(0)
    kx, kp = jax.random.split(key)
    x = jax.random.normal(kx, (B, S, D), jnp.float32)
    params = init_params(kp, D, d_ff, n_layers)

    out = encoder_forward(x, params, n_heads=n_heads)
    jax.block_until_ready(out)
    assert out.shape == (B, S, D)

    ref = encoder_reference(x, params, n_heads=n_heads)
    err = float(jnp.max(jnp.abs(out.astype(jnp.float32) - ref.astype(jnp.float32))))
    assert err < 5e-2, f"max abs error vs reference: {err}"
    print("KERNEL_OK")
</pallas_src>

<mosaic_0001>
module attributes {stable_mosaic.version = 11 : i64} {
  func.func @encoder_kernel(%arg0: i32, %arg1: memref<16x32xf32, #tpu.memory_space<vmem>>, %arg2: memref<1x9x32xf32, #tpu.memory_space<vmem>>, %arg3: memref<1x1x64xf32, #tpu.memory_space<vmem>>, %arg4: memref<1x32x32xbf16, #tpu.memory_space<vmem>>, %arg5: memref<1x32x32xbf16, #tpu.memory_space<vmem>>, %arg6: memref<1x32x32xbf16, #tpu.memory_space<vmem>>, %arg7: memref<1x32x32xbf16, #tpu.memory_space<vmem>>, %arg8: memref<1x32x64xbf16, #tpu.memory_space<vmem>>, %arg9: memref<1x64x32xbf16, #tpu.memory_space<vmem>>, %arg10: memref<16x32xf32, #tpu.memory_space<vmem>>, %arg11: memref<16x32xf32, #tpu.memory_space<vmem>>) attributes {dimension_semantics = [#tpu.dimension_semantics<arbitrary>], iteration_bounds = array<i64: 2>, scalar_prefetch = 0 : i64, scratch_operands = 1 : i64, tpu.core_type = #tpu.core_type<tc>, window_params = [{pipeline_mode = #tpu.pipeline_mode<synchronous>, transform_indices = @transform_0, window_bounds = array<i64: 16, 32>}, {transform_indices = @transform_1, window_bounds = array<i64: 1, 9, 32>}, {transform_indices = @transform_2, window_bounds = array<i64: 1, 1, 64>}, {transform_indices = @transform_3, window_bounds = array<i64: 1, 32, 32>}, {transform_indices = @transform_4, window_bounds = array<i64: 1, 32, 32>}, {transform_indices = @transform_5, window_bounds = array<i64: 1, 32, 32>}, {transform_indices = @transform_6, window_bounds = array<i64: 1, 32, 32>}, {transform_indices = @transform_7, window_bounds = array<i64: 1, 32, 64>}, {transform_indices = @transform_8, window_bounds = array<i64: 1, 64, 32>}, {pipeline_mode = #tpu.pipeline_mode<synchronous>, transform_indices = @transform_9, window_bounds = array<i64: 16, 32>}]} {
    %c0_i32 = arith.constant 0 : i32
    %0 = arith.cmpi eq, %arg0, %c0_i32 : i32
    %1 = arith.extui %0 : i1 to i32
    %c0_i32_0 = arith.constant 0 : i32
    %2 = arith.cmpi ne, %1, %c0_i32_0 : i32
    scf.if %2 {
      %c0_81 = arith.constant 0 : index
      %c0_82 = arith.constant 0 : index
      %256 = vector.load %arg1[%c0_81, %c0_82] : memref<16x32xf32, #tpu.memory_space<vmem>>, vector<16x32xf32>
      %c0_83 = arith.constant 0 : index
      %c0_84 = arith.constant 0 : index
      %257 = vector.load %arg11[%c0_83, %c0_84] : memref<16x32xf32, #tpu.memory_space<vmem>>, vector<16x32xf32>
      tpu.vector_store %arg11[%c0_83, %c0_84], %256 {strides = array<i32>} : memref<16x32xf32, #tpu.memory_space<vmem>>, vector<16x32xf32>,
    } else {
    }
    %c0 = arith.constant 0 : index
    %c0_1 = arith.constant 0 : index
    %3 = vector.load %arg11[%c0, %c0_1] : memref<16x32xf32, #tpu.memory_space<vmem>>, vector<16x32xf32>
    %c0_2 = arith.constant 0 : index
    %c0_3 = arith.constant 0 : index
    %c0_4 = arith.constant 0 : index
    %4 = vector.load %arg2[%c0_2, %c0_3, %c0_4] : memref<1x9x32xf32, #tpu.memory_space<vmem>>, vector<1x9x32xf32>
    %5 = vector.shape_cast %4 : vector<1x9x32xf32> to vector<9x32xf32>
    %6 = vector.extract_strided_slice %5 {offsets = [0, 0], sizes = [1, 32], strides = [1, 1]} : vector<9x32xf32> to vector<1x32xf32>
    %7 = vector.extract_strided_slice %5 {offsets = [1, 0], sizes = [1, 32], strides = [1, 1]} : vector<9x32xf32> to vector<1x32xf32>
    %8 = vector.extract_strided_slice %5 {offsets = [2, 0], sizes = [1, 32], strides = [1, 1]} : vector<9x32xf32> to vector<1x32xf32>
    %9 = vector.extract_strided_slice %5 {offsets = [3, 0], sizes = [1, 32], strides = [1, 1]} : vector<9x32xf32> to vector<1x32xf32>
    %10 = vector.extract_strided_slice %5 {offsets = [4, 0], sizes = [1, 32], strides = [1, 1]} : vector<9x32xf32> to vector<1x32xf32>
    %11 = vector.extract_strided_slice %5 {offsets = [5, 0], sizes = [1, 32], strides = [1, 1]} : vector<9x32xf32> to vector<1x32xf32>
    %12 = vector.extract_strided_slice %5 {offsets = [6, 0], sizes = [1, 32], strides = [1, 1]} : vector<9x32xf32> to vector<1x32xf32>
    %13 = vector.extract_strided_slice %5 {offsets = [7, 0], sizes = [1, 32], strides = [1, 1]} : vector<9x32xf32> to vector<1x32xf32>
    %14 = vector.extract_strided_slice %5 {offsets = [8, 0], sizes = [1, 32], strides = [1, 1]} : vector<9x32xf32> to vector<1x32xf32>
    %c0_5 = arith.constant 0 : index
    %c0_6 = arith.constant 0 : index
    %c0_7 = arith.constant 0 : index
    %15 = vector.load %arg3[%c0_5, %c0_6, %c0_7] : memref<1x1x64xf32, #tpu.memory_space<vmem>>, vector<1x1x64xf32>
    %16 = vector.shape_cast %15 : vector<1x1x64xf32> to vector<1x64xf32>
    %cst = arith.constant dense<0.000000e+00> : vector<16xf32>
    %17 = vector.multi_reduction <add>, %3, %cst [1] : vector<16x32xf32> to vector<16xf32>
    %18 = vector.shape_cast %17 : vector<16xf32> to vector<16x1xf32>
    %cst_8 = arith.constant 3.200000e+01 : f32
    %19 = vector.broadcast %cst_8 : f32 to vector<16x1xf32>
    %20 = arith.divf %18, %19 : vector<16x1xf32>
    %21 = vector.broadcast %20 : vector<16x1xf32> to vector<16x32xf32>
    %22 = arith.subf %3, %21 : vector<16x32xf32>
    %23 = arith.mulf %22, %22 : vector<16x32xf32>
    %cst_9 = arith.constant dense<0.000000e+00> : vector<16xf32>
    %24 = vector.multi_reduction <add>, %23, %cst_9 [1] : vector<16x32xf32> to vector<16xf32>
    %25 = vector.shape_cast %24 : vector<16xf32> to vector<16x1xf32>
    %cst_10 = arith.constant 3.200000e+01 : f32
    %26 = vector.broadcast %cst_10 : f32 to vector<16x1xf32>
    %27 = arith.divf %25, %26 : vector<16x1xf32>
    %28 = vector.broadcast %20 : vector<16x1xf32> to vector<16x32xf32>
    %29 = arith.subf %3, %28 : vector<16x32xf32>
    %cst_11 = arith.constant 9.99999974E-6 : f32
    %30 = vector.broadcast %cst_11 : f32 to vector<16x1xf32>
    %31 = arith.addf %27, %30 : vector<16x1xf32>
    %32 = math.rsqrt %31 : vector<16x1xf32>
    %33 = vector.broadcast %32 : vector<16x1xf32> to vector<16x32xf32>
    %34 = arith.mulf %29, %33 : vector<16x32xf32>
    %35 = vector.broadcast %6 : vector<1x32xf32> to vector<16x32xf32>
    %36 = arith.mulf %34, %35 : vector<16x32xf32>
    %37 = vector.broadcast %7 : vector<1x32xf32> to vector<16x32xf32>
    %38 = arith.addf %36, %37 : vector<16x32xf32>
    %39 = arith.truncf %38 : vector<16x32xf32> to vector<16x32xbf16>
    %c0_12 = arith.constant 0 : index
    %c0_13 = arith.constant 0 : index
    %c0_14 = arith.constant 0 : index
    %40 = vector.load %arg4[%c0_12, %c0_13, %c0_14] : memref<1x32x32xbf16, #tpu.memory_space<vmem>>, vector<1x32x32xbf16>
    %41 = vector.shape_cast %40 : vector<1x32x32xbf16> to vector<32x32xbf16>
    %cst_15 = arith.constant dense<0.000000e+00> : vector<16x32xf32>
    %42 = tpu.matmul %39, %41, %cst_15 {dimension_numbers = #tpu.dot_dimension_numbers<[1], [0], [0], [1], [0, 0, 1, 1], [], []>} : vector<16x32xbf16>, vector<32x32xbf16>, vector<16x32xf32> -> vector<16x32xf32>
    %43 = vector.broadcast %8 : vector<1x32xf32> to vector<16x32xf32>
    %44 = arith.addf %42, %43 : vector<16x32xf32>
    %c0_16 = arith.constant 0 : index
    %c0_17 = arith.constant 0 : index
    %c0_18 = arith.constant 0 : index
    %45 = vector.load %arg5[%c0_16, %c0_17, %c0_18] : memref<1x32x32xbf16, #tpu.memory_space<vmem>>, vector<1x32x32xbf16>
    %46 = vector.shape_cast %45 : vector<1x32x32xbf16> to vector<32x32xbf16>
    %cst_19 = arith.constant dense<0.000000e+00> : vector<16x32xf32>
    %47 = tpu.matmul %39, %46, %cst_19 {dimension_numbers = #tpu.dot_dimension_numbers<[1], [0], [0], [1], [0, 0, 1, 1], [], []>} : vector<16x32xbf16>, vector<32x32xbf16>, vector<16x32xf32> -> vector<16x32xf32>
    %48 = vector.broadcast %9 : vector<1x32xf32> to vector<16x32xf32>
    %49 = arith.addf %47, %48 : vector<16x32xf32>
    %c0_20 = arith.constant 0 : index
    %c0_21 = arith.constant 0 : index
    %c0_22 = arith.constant 0 : index
    %50 = vector.load %arg6[%c0_20, %c0_21, %c0_22] : memref<1x32x32xbf16, #tpu.memory_space<vmem>>, vector<1x32x32xbf16>
    %51 = vector.shape_cast %50 : vector<1x32x32xbf16> to vector<32x32xbf16>
    %cst_23 = arith.constant dense<0.000000e+00> : vector<16x32xf32>
    %52 = tpu.matmul %39, %51, %cst_23 {dimension_numbers = #tpu.dot_dimension_numbers<[1], [0], [0], [1], [0, 0, 1, 1], [], []>} : vector<16x32xbf16>, vector<32x32xbf16>, vector<16x32xf32> -> vector<16x32xf32>
    %53 = vector.broadcast %10 : vector<1x32xf32> to vector<16x32xf32>
    %54 = arith.addf %52, %53 : vector<16x32xf32>
    %cst_24 = arith.constant 0.353553385 : f32
    %55 = vector.broadcast %cst_24 : f32 to vector<16x32xf32>
    %56 = arith.mulf %44, %55 : vector<16x32xf32>
    %57 = arith.truncf %56 : vector<16x32xf32> to vector<16x32xbf16>
    %58 = arith.truncf %49 : vector<16x32xf32> to vector<16x32xbf16>
    %59 = arith.truncf %54 : vector<16x32xf32> to vector<16x32xbf16>
    %60 = vector.extract_strided_slice %57 {offsets = [0, 0], sizes = [8, 32], strides = [1, 1]} : vector<16x32xbf16> to vector<8x32xbf16>
    %61 = vector.extract_strided_slice %58 {offsets = [0, 0], sizes = [8, 32], strides = [1, 1]} : vector<16x32xbf16> to vector<8x32xbf16>
    %62 = vector.extract_strided_slice %59 {offsets = [0, 0], sizes = [8, 32], strides = [1, 1]} : vector<16x32xbf16> to vector<8x32xbf16>
    %63 = vector.extract_strided_slice %60 {offsets = [0, 0], sizes = [8, 8], strides = [1, 1]} : vector<8x32xbf16> to vector<8x8xbf16>
    %64 = vector.extract_strided_slice %61 {offsets = [0, 0], sizes = [8, 8], strides = [1, 1]} : vector<8x32xbf16> to vector<8x8xbf16>
    %65 = vector.extract_strided_slice %62 {offsets = [0, 0], sizes = [8, 8], strides = [1, 1]} : vector<8x32xbf16> to vector<8x8xbf16>
    %cst_25 = arith.constant dense<0.000000e+00> : vector<8x8xf32>
    %66 = tpu.matmul %63, %64, %cst_25 {dimension_numbers = #tpu.dot_dimension_numbers<[1], [1], [0], [0], [0, 0, 1, 0], [], []>} : vector<8x8xbf16>, vector<8x8xbf16>, vector<8x8xf32> -> vector<8x8xf32>
    %cst_26 = arith.constant dense<0xFF800000> : vector<8xf32>
    %67 = vector.multi_reduction <maximumf>, %66, %cst_26 [1] : vector<8x8xf32> to vector<8xf32>
    %68 = vector.shape_cast %67 : vector<8xf32> to vector<8x1xf32>
    %69 = vector.broadcast %68 : vector<8x1xf32> to vector<8x8xf32>
    %70 = arith.subf %66, %69 : vector<8x8xf32>
    %71 = math.exp %70 : vector<8x8xf32>
    %cst_27 = arith.constant dense<0.000000e+00> : vector<8xf32>
    %72 = vector.multi_reduction <add>, %71, %cst_27 [1] : vector<8x8xf32> to vector<8xf32>
    %73 = vector.shape_cast %72 : vector<8xf32> to vector<8x1xf32>
    %74 = arith.truncf %71 : vector<8x8xf32> to vector<8x8xbf16>
    %cst_28 = arith.constant dense<0.000000e+00> : vector<8x8xf32>
    %75 = tpu.matmul %74, %65, %cst_28 {dimension_numbers = #tpu.dot_dimension_numbers<[1], [0], [0], [1], [0, 0, 1, 1], [], []>} : vector<8x8xbf16>, vector<8x8xbf16>, vector<8x8xf32> -> vector<8x8xf32>
    %76 = tpu.reciprocal %73 {approx = true} : vector<8x1xf32> -> vector<8x1xf32>
    %77 = vector.broadcast %76 : vector<8x1xf32> to vector<8x8xf32>
    %78 = arith.mulf %75, %77 : vector<8x8xf32>
    %79 = vector.extract_strided_slice %60 {offsets = [0, 8], sizes = [8, 8], strides = [1, 1]} : vector<8x32xbf16> to vector<8x8xbf16>
    %80 = vector.extract_strided_slice %61 {offsets = [0, 8], sizes = [8, 8], strides = [1, 1]} : vector<8x32xbf16> to vector<8x8xbf16>
    %81 = vector.extract_strided_slice %62 {offsets = [0, 8], sizes = [8, 8], strides = [1, 1]} : vector<8x32xbf16> to vector<8x8xbf16>
    %cst_29 = arith.constant dense<0.000000e+00> : vector<8x8xf32>
    %82 = tpu.matmul %79, %80, %cst_29 {dimension_numbers = #tpu.dot_dimension_numbers<[1], [1], [0], [0], [0, 0, 1, 0], [], []>} : vector<8x8xbf16>, vector<8x8xbf16>, vector<8x8xf32> -> vector<8x8xf32>
    %cst_30 = arith.constant dense<0xFF800000> : vector<8xf32>
    %83 = vector.multi_reduction <maximumf>, %82, %cst_30 [1] : vector<8x8xf32> to vector<8xf32>
    %84 = vector.shape_cast %83 : vector<8xf32> to vector<8x1xf32>
    %85 = vector.broadcast %84 : vector<8x1xf32> to vector<8x8xf32>
    %86 = arith.subf %82, %85 : vector<8x8xf32>
    %87 = math.exp %86 : vector<8x8xf32>
    %cst_31 = arith.constant dense<0.000000e+00> : vector<8xf32>
    %88 = vector.multi_reduction <add>, %87, %cst_31 [1] : vector<8x8xf32> to vector<8xf32>
    %89 = vector.shape_cast %88 : vector<8xf32> to vector<8x1xf32>
    %90 = arith.truncf %87 : vector<8x8xf32> to vector<8x8xbf16>
    %cst_32 = arith.constant dense<0.000000e+00> : vector<8x8xf32>
    %91 = tpu.matmul %90, %81, %cst_32 {dimension_numbers = #tpu.dot_dimension_numbers<[1], [0], [0], [1], [0, 0, 1, 1], [], []>} : vector<8x8xbf16>, vector<8x8xbf16>, vector<8x8xf32> -> vector<8x8xf32>
    %92 = tpu.reciprocal %89 {approx = true} : vector<8x1xf32> -> vector<8x1xf32>
    %93 = vector.broadcast %92 : vector<8x1xf32> to vector<8x8xf32>
    %94 = arith.mulf %91, %93 : vector<8x8xf32>
    %95 = vector.extract_strided_slice %60 {offsets = [0, 16], sizes = [8, 8], strides = [1, 1]} : vector<8x32xbf16> to vector<8x8xbf16>
    %96 = vector.extract_strided_slice %61 {offsets = [0, 16], sizes = [8, 8], strides = [1, 1]} : vector<8x32xbf16> to vector<8x8xbf16>
    %97 = vector.extract_strided_slice %62 {offsets = [0, 16], sizes = [8, 8], strides = [1, 1]} : vector<8x32xbf16> to vector<8x8xbf16>
    %cst_33 = arith.constant dense<0.000000e+00> : vector<8x8xf32>
    %98 = tpu.matmul %95, %96, %cst_33 {dimension_numbers = #tpu.dot_dimension_numbers<[1], [1], [0], [0], [0, 0, 1, 0], [], []>} : vector<8x8xbf16>, vector<8x8xbf16>, vector<8x8xf32> -> vector<8x8xf32>
    %cst_34 = arith.constant dense<0xFF800000> : vector<8xf32>
    %99 = vector.multi_reduction <maximumf>, %98, %cst_34 [1] : vector<8x8xf32> to vector<8xf32>
    %100 = vector.shape_cast %99 : vector<8xf32> to vector<8x1xf32>
    %101 = vector.broadcast %100 : vector<8x1xf32> to vector<8x8xf32>
    %102 = arith.subf %98, %101 : vector<8x8xf32>
    %103 = math.exp %102 : vector<8x8xf32>
    %cst_35 = arith.constant dense<0.000000e+00> : vector<8xf32>
    %104 = vector.multi_reduction <add>, %103, %cst_35 [1] : vector<8x8xf32> to vector<8xf32>
    %105 = vector.shape_cast %104 : vector<8xf32> to vector<8x1xf32>
    %106 = arith.truncf %103 : vector<8x8xf32> to vector<8x8xbf16>
    %cst_36 = arith.constant dense<0.000000e+00> : vector<8x8xf32>
    %107 = tpu.matmul %106, %97, %cst_36 {dimension_numbers = #tpu.dot_dimension_numbers<[1], [0], [0], [1], [0, 0, 1, 1], [], []>} : vector<8x8xbf16>, vector<8x8xbf16>, vector<8x8xf32> -> vector<8x8xf32>
    %108 = tpu.reciprocal %105 {approx = true} : vector<8x1xf32> -> vector<8x1xf32>
    %109 = vector.broadcast %108 : vector<8x1xf32> to vector<8x8xf32>
    %110 = arith.mulf %107, %109 : vector<8x8xf32>
    %111 = vector.extract_strided_slice %60 {offsets = [0, 24], sizes = [8, 8], strides = [1, 1]} : vector<8x32xbf16> to vector<8x8xbf16>
    %112 = vector.extract_strided_slice %61 {offsets = [0, 24], sizes = [8, 8], strides = [1, 1]} : vector<8x32xbf16> to vector<8x8xbf16>
    %113 = vector.extract_strided_slice %62 {offsets = [0, 24], sizes = [8, 8], strides = [1, 1]} : vector<8x32xbf16> to vector<8x8xbf16>
    %cst_37 = arith.constant dense<0.000000e+00> : vector<8x8xf32>
    %114 = tpu.matmul %111, %112, %cst_37 {dimension_numbers = #tpu.dot_dimension_numbers<[1], [1], [0], [0], [0, 0, 1, 0], [], []>} : vector<8x8xbf16>, vector<8x8xbf16>, vector<8x8xf32> -> vector<8x8xf32>
    %cst_38 = arith.constant dense<0xFF800000> : vector<8xf32>
    %115 = vector.multi_reduction <maximumf>, %114, %cst_38 [1] : vector<8x8xf32> to vector<8xf32>
    %116 = vector.shape_cast %115 : vector<8xf32> to vector<8x1xf32>
    %117 = vector.broadcast %116 : vector<8x1xf32> to vector<8x8xf32>
    %118 = arith.subf %114, %117 : vector<8x8xf32>
    %119 = math.exp %118 : vector<8x8xf32>
    %cst_39 = arith.constant dense<0.000000e+00> : vector<8xf32>
    %120 = vector.multi_reduction <add>, %119, %cst_39 [1] : vector<8x8xf32> to vector<8xf32>
    %121 = vector.shape_cast %120 : vector<8xf32> to vector<8x1xf32>
    %122 = arith.truncf %119 : vector<8x8xf32> to vector<8x8xbf16>
    %cst_40 = arith.constant dense<0.000000e+00> : vector<8x8xf32>
    %123 = tpu.matmul %122, %113, %cst_40 {dimension_numbers = #tpu.dot_dimension_numbers<[1], [0], [0], [1], [0, 0, 1, 1], [], []>} : vector<8x8xbf16>, vector<8x8xbf16>, vector<8x8xf32> -> vector<8x8xf32>
    %124 = tpu.reciprocal %121 {approx = true} : vector<8x1xf32> -> vector<8x1xf32>
    %125 = vector.broadcast %124 : vector<8x1xf32> to vector<8x8xf32>
    %126 = arith.mulf %123, %125 : vector<8x8xf32>
    %127 = tpu.concatenate %78, %94, %110, %126 in 1 : vector<8x8xf32>, vector<8x8xf32>, vector<8x8xf32>, vector<8x8xf32> -> vector<8x32xf32>
    %128 = vector.extract_strided_slice %57 {offsets = [8, 0], sizes = [8, 32], strides = [1, 1]} : vector<16x32xbf16> to vector<8x32xbf16>
    %129 = vector.extract_strided_slice %58 {offsets = [8, 0], sizes = [8, 32], strides = [1, 1]} : vector<16x32xbf16> to vector<8x32xbf16>
    %130 = vector.extract_strided_slice %59 {offsets = [8, 0], sizes = [8, 32], strides = [1, 1]} : vector<16x32xbf16> to vector<8x32xbf16>
    %131 = vector.extract_strided_slice %128 {offsets = [0, 0], sizes = [8, 8], strides = [1, 1]} : vector<8x32xbf16> to vector<8x8xbf16>
    %132 = vector.extract_strided_slice %129 {offsets = [0, 0], sizes = [8, 8], strides = [1, 1]} : vector<8x32xbf16> to vector<8x8xbf16>
    %133 = vector.extract_strided_slice %130 {offsets = [0, 0], sizes = [8, 8], strides = [1, 1]} : vector<8x32xbf16> to vector<8x8xbf16>
    %cst_41 = arith.constant dense<0.000000e+00> : vector<8x8xf32>
    %134 = tpu.matmul %131, %132, %cst_41 {dimension_numbers = #tpu.dot_dimension_numbers<[1], [1], [0], [0], [0, 0, 1, 0], [], []>} : vector<8x8xbf16>, vector<8x8xbf16>, vector<8x8xf32> -> vector<8x8xf32>
    %cst_42 = arith.constant dense<0xFF800000> : vector<8xf32>
    %135 = vector.multi_reduction <maximumf>, %134, %cst_42 [1] : vector<8x8xf32> to vector<8xf32>
    %136 = vector.shape_cast %135 : vector<8xf32> to vector<8x1xf32>
    %137 = vector.broadcast %136 : vector<8x1xf32> to vector<8x8xf32>
    %138 = arith.subf %134, %137 : vector<8x8xf32>
    %139 = math.exp %138 : vector<8x8xf32>
    %cst_43 = arith.constant dense<0.000000e+00> : vector<8xf32>
    %140 = vector.multi_reduction <add>, %139, %cst_43 [1] : vector<8x8xf32> to vector<8xf32>
    %141 = vector.shape_cast %140 : vector<8xf32> to vector<8x1xf32>
    %142 = arith.truncf %139 : vector<8x8xf32> to vector<8x8xbf16>
    %cst_44 = arith.constant dense<0.000000e+00> : vector<8x8xf32>
    %143 = tpu.matmul %142, %133, %cst_44 {dimension_numbers = #tpu.dot_dimension_numbers<[1], [0], [0], [1], [0, 0, 1, 1], [], []>} : vector<8x8xbf16>, vector<8x8xbf16>, vector<8x8xf32> -> vector<8x8xf32>
    %144 = tpu.reciprocal %141 {approx = true} : vector<8x1xf32> -> vector<8x1xf32>
    %145 = vector.broadcast %144 : vector<8x1xf32> to vector<8x8xf32>
    %146 = arith.mulf %143, %145 : vector<8x8xf32>
    %147 = vector.extract_strided_slice %128 {offsets = [0, 8], sizes = [8, 8], strides = [1, 1]} : vector<8x32xbf16> to vector<8x8xbf16>
    %148 = vector.extract_strided_slice %129 {offsets = [0, 8], sizes = [8, 8], strides = [1, 1]} : vector<8x32xbf16> to vector<8x8xbf16>
    %149 = vector.extract_strided_slice %130 {offsets = [0, 8], sizes = [8, 8], strides = [1, 1]} : vector<8x32xbf16> to vector<8x8xbf16>
    %cst_45 = arith.constant dense<0.000000e+00> : vector<8x8xf32>
    %150 = tpu.matmul %147, %148, %cst_45 {dimension_numbers = #tpu.dot_dimension_numbers<[1], [1], [0], [0], [0, 0, 1, 0], [], []>} : vector<8x8xbf16>, vector<8x8xbf16>, vector<8x8xf32> -> vector<8x8xf32>
    %cst_46 = arith.constant dense<0xFF800000> : vector<8xf32>
    %151 = vector.multi_reduction <maximumf>, %150, %cst_46 [1] : vector<8x8xf32> to vector<8xf32>
    %152 = vector.shape_cast %151 : vector<8xf32> to vector<8x1xf32>
    %153 = vector.broadcast %152 : vector<8x1xf32> to vector<8x8xf32>
    %154 = arith.subf %150, %153 : vector<8x8xf32>
    %155 = math.exp %154 : vector<8x8xf32>
    %cst_47 = arith.constant dense<0.000000e+00> : vector<8xf32>
    %156 = vector.multi_reduction <add>, %155, %cst_47 [1] : vector<8x8xf32> to vector<8xf32>
    %157 = vector.shape_cast %156 : vector<8xf32> to vector<8x1xf32>
    %158 = arith.truncf %155 : vector<8x8xf32> to vector<8x8xbf16>
    %cst_48 = arith.constant dense<0.000000e+00> : vector<8x8xf32>
    %159 = tpu.matmul %158, %149, %cst_48 {dimension_numbers = #tpu.dot_dimension_numbers<[1], [0], [0], [1], [0, 0, 1, 1], [], []>} : vector<8x8xbf16>, vector<8x8xbf16>, vector<8x8xf32> -> vector<8x8xf32>
    %160 = tpu.reciprocal %157 {approx = true} : vector<8x1xf32> -> vector<8x1xf32>
    %161 = vector.broadcast %160 : vector<8x1xf32> to vector<8x8xf32>
    %162 = arith.mulf %159, %161 : vector<8x8xf32>
    %163 = vector.extract_strided_slice %128 {offsets = [0, 16], sizes = [8, 8], strides = [1, 1]} : vector<8x32xbf16> to vector<8x8xbf16>
    %164 = vector.extract_strided_slice %129 {offsets = [0, 16], sizes = [8, 8], strides = [1, 1]} : vector<8x32xbf16> to vector<8x8xbf16>
    %165 = vector.extract_strided_slice %130 {offsets = [0, 16], sizes = [8, 8], strides = [1, 1]} : vector<8x32xbf16> to vector<8x8xbf16>
    %cst_49 = arith.constant dense<0.000000e+00> : vector<8x8xf32>
    %166 = tpu.matmul %163, %164, %cst_49 {dimension_numbers = #tpu.dot_dimension_numbers<[1], [1], [0], [0], [0, 0, 1, 0], [], []>} : vector<8x8xbf16>, vector<8x8xbf16>, vector<8x8xf32> -> vector<8x8xf32>
    %cst_50 = arith.constant dense<0xFF800000> : vector<8xf32>
    %167 = vector.multi_reduction <maximumf>, %166, %cst_50 [1] : vector<8x8xf32> to vector<8xf32>
    %168 = vector.shape_cast %167 : vector<8xf32> to vector<8x1xf32>
    %169 = vector.broadcast %168 : vector<8x1xf32> to vector<8x8xf32>
    %170 = arith.subf %166, %169 : vector<8x8xf32>
    %171 = math.exp %170 : vector<8x8xf32>
    %cst_51 = arith.constant dense<0.000000e+00> : vector<8xf32>
    %172 = vector.multi_reduction <add>, %171, %cst_51 [1] : vector<8x8xf32> to vector<8xf32>
    %173 = vector.shape_cast %172 : vector<8xf32> to vector<8x1xf32>
    %174 = arith.truncf %171 : vector<8x8xf32> to vector<8x8xbf16>
    %cst_52 = arith.constant dense<0.000000e+00> : vector<8x8xf32>
    %175 = tpu.matmul %174, %165, %cst_52 {dimension_numbers = #tpu.dot_dimension_numbers<[1], [0], [0], [1], [0, 0, 1, 1], [], []>} : vector<8x8xbf16>, vector<8x8xbf16>, vector<8x8xf32> -> vector<8x8xf32>
    %176 = tpu.reciprocal %173 {approx = true} : vector<8x1xf32> -> vector<8x1xf32>
    %177 = vector.broadcast %176 : vector<8x1xf32> to vector<8x8xf32>
    %178 = arith.mulf %175, %177 : vector<8x8xf32>
    %179 = vector.extract_strided_slice %128 {offsets = [0, 24], sizes = [8, 8], strides = [1, 1]} : vector<8x32xbf16> to vector<8x8xbf16>
    %180 = vector.extract_strided_slice %129 {offsets = [0, 24], sizes = [8, 8], strides = [1, 1]} : vector<8x32xbf16> to vector<8x8xbf16>
    %181 = vector.extract_strided_slice %130 {offsets = [0, 24], sizes = [8, 8], strides = [1, 1]} : vector<8x32xbf16> to vector<8x8xbf16>
    %cst_53 = arith.constant dense<0.000000e+00> : vector<8x8xf32>
    %182 = tpu.matmul %179, %180, %cst_53 {dimension_numbers = #tpu.dot_dimension_numbers<[1], [1], [0], [0], [0, 0, 1, 0], [], []>} : vector<8x8xbf16>, vector<8x8xbf16>, vector<8x8xf32> -> vector<8x8xf32>
    %cst_54 = arith.constant dense<0xFF800000> : vector<8xf32>
    %183 = vector.multi_reduction <maximumf>, %182, %cst_54 [1] : vector<8x8xf32> to vector<8xf32>
    %184 = vector.shape_cast %183 : vector<8xf32> to vector<8x1xf32>
    %185 = vector.broadcast %184 : vector<8x1xf32> to vector<8x8xf32>
    %186 = arith.subf %182, %185 : vector<8x8xf32>
    %187 = math.exp %186 : vector<8x8xf32>
    %cst_55 = arith.constant dense<0.000000e+00> : vector<8xf32>
    %188 = vector.multi_reduction <add>, %187, %cst_55 [1] : vector<8x8xf32> to vector<8xf32>
    %189 = vector.shape_cast %188 : vector<8xf32> to vector<8x1xf32>
    %190 = arith.truncf %187 : vector<8x8xf32> to vector<8x8xbf16>
    %cst_56 = arith.constant dense<0.000000e+00> : vector<8x8xf32>
    %191 = tpu.matmul %190, %181, %cst_56 {dimension_numbers = #tpu.dot_dimension_numbers<[1], [0], [0], [1], [0, 0, 1, 1], [], []>} : vector<8x8xbf16>, vector<8x8xbf16>, vector<8x8xf32> -> vector<8x8xf32>
    %192 = tpu.reciprocal %189 {approx = true} : vector<8x1xf32> -> vector<8x1xf32>
    %193 = vector.broadcast %192 : vector<8x1xf32> to vector<8x8xf32>
    %194 = arith.mulf %191, %193 : vector<8x8xf32>
    %195 = tpu.concatenate %146, %162, %178, %194 in 1 : vector<8x8xf32>, vector<8x8xf32>, vector<8x8xf32>, vector<8x8xf32> -> vector<8x32xf32>
    %196 = tpu.concatenate %127, %195 in 0 : vector<8x32xf32>, vector<8x32xf32> -> vector<16x32xf32>
    %197 = arith.truncf %196 : vector<16x32xf32> to vector<16x32xbf16>
    %c0_57 = arith.constant 0 : index
    %c0_58 = arith.constant 0 : index
    %c0_59 = arith.constant 0 : index
    %198 = vector.load %arg7[%c0_57, %c0_58, %c0_59] : memref<1x32x32xbf16, #tpu.memory_space<vmem>>, vector<1x32x32xbf16>
    %199 = vector.shape_cast %198 : vector<1x32x32xbf16> to vector<32x32xbf16>
    %cst_60 = arith.constant dense<0.000000e+00> : vector<16x32xf32>
    %200 = tpu.matmul %197, %199, %cst_60 {dimension_numbers = #tpu.dot_dimension_numbers<[1], [0], [0], [1], [0, 0, 1, 1], [], []>} : vector<16x32xbf16>, vector<32x32xbf16>, vector<16x32xf32> -> vector<16x32xf32>
    %201 = vector.broadcast %11 : vector<1x32xf32> to vector<16x32xf32>
    %202 = arith.addf %200, %201 : vector<16x32xf32>
    %203 = arith.addf %3, %202 : vector<16x32xf32>
    %cst_61 = arith.constant dense<0.000000e+00> : vector<16xf32>
    %204 = vector.multi_reduction <add>, %203, %cst_61 [1] : vector<16x32xf32> to vector<16xf32>
    %205 = vector.shape_cast %204 : vector<16xf32> to vector<16x1xf32>
    %cst_62 = arith.constant 3.200000e+01 : f32
    %206 = vector.broadcast %cst_62 : f32 to vector<16x1xf32>
    %207 = arith.divf %205, %206 : vector<16x1xf32>
    %208 = vector.broadcast %207 : vector<16x1xf32> to vector<16x32xf32>
    %209 = arith.subf %203, %208 : vector<16x32xf32>
    %210 = arith.mulf %209, %209 : vector<16x32xf32>
    %cst_63 = arith.constant dense<0.000000e+00> : vector<16xf32>
    %211 = vector.multi_reduction <add>, %210, %cst_63 [1] : vector<16x32xf32> to vector<16xf32>
    %212 = vector.shape_cast %211 : vector<16xf32> to vector<16x1xf32>
    %cst_64 = arith.constant 3.200000e+01 : f32
    %213 = vector.broadcast %cst_64 : f32 to vector<16x1xf32>
    %214 = arith.divf %212, %213 : vector<16x1xf32>
    %215 = vector.broadcast %207 : vector<16x1xf32> to vector<16x32xf32>
    %216 = arith.subf %203, %215 : vector<16x32xf32>
    %cst_65 = arith.constant 9.99999974E-6 : f32
    %217 = vector.broadcast %cst_65 : f32 to vector<16x1xf32>
    %218 = arith.addf %214, %217 : vector<16x1xf32>
    %219 = math.rsqrt %218 : vector<16x1xf32>
    %220 = vector.broadcast %219 : vector<16x1xf32> to vector<16x32xf32>
    %221 = arith.mulf %216, %220 : vector<16x32xf32>
    %222 = vector.broadcast %12 : vector<1x32xf32> to vector<16x32xf32>
    %223 = arith.mulf %221, %222 : vector<16x32xf32>
    %224 = vector.broadcast %13 : vector<1x32xf32> to vector<16x32xf32>
    %225 = arith.addf %223, %224 : vector<16x32xf32>
    %226 = arith.truncf %225 : vector<16x32xf32> to vector<16x32xbf16>
    %c0_66 = arith.constant 0 : index
    %c0_67 = arith.constant 0 : index
    %c0_68 = arith.constant 0 : index
    %227 = vector.load %arg8[%c0_66, %c0_67, %c0_68] : memref<1x32x64xbf16, #tpu.memory_space<vmem>>, vector<1x32x64xbf16>
    %228 = vector.shape_cast %227 : vector<1x32x64xbf16> to vector<32x64xbf16>
    %cst_69 = arith.constant dense<0.000000e+00> : vector<16x64xf32>
    %229 = tpu.matmul %226, %228, %cst_69 {dimension_numbers = #tpu.dot_dimension_numbers<[1], [0], [0], [1], [0, 0, 1, 1], [], []>} : vector<16x32xbf16>, vector<32x64xbf16>, vector<16x64xf32> -> vector<16x64xf32>
    %230 = vector.broadcast %16 : vector<1x64xf32> to vector<16x64xf32>
    %231 = arith.addf %229, %230 : vector<16x64xf32>
    %232 = arith.mulf %231, %231 : vector<16x64xf32>
    %233 = arith.mulf %231, %232 : vector<16x64xf32>
    %cst_70 = arith.constant 4.471500e-02 : f32
    %234 = vector.broadcast %cst_70 : f32 to vector<16x64xf32>
    %235 = arith.mulf %234, %233 : vector<16x64xf32>
    %236 = arith.addf %231, %235 : vector<16x64xf32>
    %cst_71 = arith.constant 0.797884583 : f32
    %237 = vector.broadcast %cst_71 : f32 to vector<16x64xf32>
    %238 = arith.mulf %237, %236 : vector<16x64xf32>
    %239 = math.tanh %238 : vector<16x64xf32>
    %cst_72 = arith.constant 1.000000e+00 : f32
    %240 = vector.broadcast %cst_72 : f32 to vector<16x64xf32>
    %241 = arith.addf %240, %239 : vector<16x64xf32>
    %cst_73 = arith.constant 5.000000e-01 : f32
    %242 = vector.broadcast %cst_73 : f32 to vector<16x64xf32>
    %243 = arith.mulf %242, %241 : vector<16x64xf32>
    %244 = arith.mulf %231, %243 : vector<16x64xf32>
    %245 = arith.truncf %244 : vector<16x64xf32> to vector<16x64xbf16>
    %c0_74 = arith.constant 0 : index
    %c0_75 = arith.constant 0 : index
    %c0_76 = arith.constant 0 : index
    %246 = vector.load %arg9[%c0_74, %c0_75, %c0_76] : memref<1x64x32xbf16, #tpu.memory_space<vmem>>, vector<1x64x32xbf16>
    %247 = vector.shape_cast %246 : vector<1x64x32xbf16> to vector<64x32xbf16>
    %cst_77 = arith.constant dense<0.000000e+00> : vector<16x32xf32>
    %248 = tpu.matmul %245, %247, %cst_77 {dimension_numbers = #tpu.dot_dimension_numbers<[1], [0], [0], [1], [0, 0, 1, 1], [], []>} : vector<16x64xbf16>, vector<64x32xbf16>, vector<16x32xf32> -> vector<16x32xf32>
    %249 = vector.broadcast %14 : vector<1x32xf32> to vector<16x32xf32>
    %250 = arith.addf %248, %249 : vector<16x32xf32>
    %251 = arith.addf %203, %250 : vector<16x32xf32>
    %c0_78 = arith.constant 0 : index
    %c0_79 = arith.constant 0 : index
    %252 = vector.load %arg11[%c0_78, %c0_79] : memref<16x32xf32, #tpu.memory_space<vmem>>, vector<16x32xf32>
    tpu.vector_store %arg11[%c0_78, %c0_79], %251 {strides = array<i32>} : memref<16x32xf32, #tpu.memory_space<vmem>>, vector<16x32xf32>,
    %c1_i32 = arith.constant 1 : i32
    %253 = arith.cmpi eq, %arg0, %c1_i32 : i32
    %254 = arith.extui %253 : i1 to i32
    %c0_i32_80 = arith.constant 0 : i32
    %255 = arith.cmpi ne, %254, %c0_i32_80 : i32
    scf.if %255 {
      %c0_81 = arith.constant 0 : index
      %c0_82 = arith.constant 0 : index
      %256 = vector.load %arg10[%c0_81, %c0_82] : memref<16x32xf32, #tpu.memory_space<vmem>>, vector<16x32xf32>
      tpu.vector_store %arg10[%c0_81, %c0_82], %251 {strides = array<i32>} : memref<16x32xf32, #tpu.memory_space<vmem>>, vector<16x32xf32>,
    } else {
    }
    return
  }
  func.func @transform_0(%arg0: i32) -> (i32, i32) {
    %c0_i32 = arith.constant 0 : i32
    %c0_i32_0 = arith.constant 0 : i32
    %c0_i32_1 = arith.constant 0 : i32
    return %c0_i32, %c0_i32_0 : i32, i32
  }
  func.func @transform_1(%arg0: i32) -> (i32, i32, i32) {
    %c0_i32 = arith.constant 0 : i32
    %c0_i32_0 = arith.constant 0 : i32
    %c0_i32_1 = arith.constant 0 : i32
    return %arg0, %c0_i32, %c0_i32_0 : i32, i32, i32
  }
  func.func @transform_2(%arg0: i32) -> (i32, i32, i32) {
    %c0_i32 = arith.constant 0 : i32
    %c0_i32_0 = arith.constant 0 : i32
    %c0_i32_1 = arith.constant 0 : i32
    return %arg0, %c0_i32, %c0_i32_0 : i32, i32, i32
  }
  func.func @transform_3(%arg0: i32) -> (i32, i32, i32) {
    %c0_i32 = arith.constant 0 : i32
    %c0_i32_0 = arith.constant 0 : i32
    %c0_i32_1 = arith.constant 0 : i32
    return %arg0, %c0_i32, %c0_i32_0 : i32, i32, i32
  }
  func.func @transform_4(%arg0: i32) -> (i32, i32, i32) {
    %c0_i32 = arith.constant 0 : i32
    %c0_i32_0 = arith.constant 0 : i32
    %c0_i32_1 = arith.constant 0 : i32
    return %arg0, %c0_i32, %c0_i32_0 : i32, i32, i32
  }
  func.func @transform_5(%arg0: i32) -> (i32, i32, i32) {
    %c0_i32 = arith.constant 0 : i32
    %c0_i32_0 = arith.constant 0 : i32
    %c0_i32_1 = arith.constant 0 : i32
    return %arg0, %c0_i32, %c0_i32_0 : i32, i32, i32
  }
  func.func @transform_6(%arg0: i32) -> (i32, i32, i32) {
    %c0_i32 = arith.constant 0 : i32
    %c0_i32_0 = arith.constant 0 : i32
    %c0_i32_1 = arith.constant 0 : i32
    return %arg0, %c0_i32, %c0_i32_0 : i32, i32, i32
  }
  func.func @transform_7(%arg0: i32) -> (i32, i32, i32) {
    %c0_i32 = arith.constant 0 : i32
    %c0_i32_0 = arith.constant 0 : i32
    %c0_i32_1 = arith.constant 0 : i32
    return %arg0, %c0_i32, %c0_i32_0 : i32, i32, i32
  }
  func.func @transform_8(%arg0: i32) -> (i32, i32, i32) {
    %c0_i32 = arith.constant 0 : i32
    %c0_i32_0 = arith.constant 0 : i32
    %c0_i32_1 = arith.constant 0 : i32
    return %arg0, %c0_i32, %c0_i32_0 : i32, i32, i32
  }
  func.func @transform_9(%arg0: i32) -> (i32, i32) {
    %c0_i32 = arith.constant 0 : i32
    %c0_i32_0 = arith.constant 0 : i32
    %c0_i32_1 = arith.constant 0 : i32
    return %c0_i32, %c0_i32_0 : i32, i32
  }
}

</mosaic_0001>

<llo_original>
// kernel: tpu_custom_call.1
$region0: #{tpu_custom_call.1}
  #allocation0 [shape = 'u32[]', space=smem, size = 0x4, offset = 0x4, fixed_abs, tag = 'smem constant byte address 0x4 - core index']
  #allocation1 [shape = 'u32[144,128]{1,0:T(1,128)}', space=vmem, size = 0x12000, scoped, tag = 'internal scratch']
  #allocation2 [shape = 'f32[16,32]{1,0:T(8,128)}', space=vmem, size = 0x2000, scoped, tag = 'scratch operand']
  %s0 = inlined_call_operand.hbm [shape: f32[16,32], index: 0, kind: input, shape index: {}]
  %s1 = inlined_call_operand.hbm [shape: f32[2,9,32], index: 1, kind: input, shape index: {}]
  %s2 = inlined_call_operand.hbm [shape: f32[2,1,64], index: 2, kind: input, shape index: {}]
  %s3 = inlined_call_operand.hbm [shape: bf16[2,32,32], index: 3, kind: input, shape index: {}]
  %s4 = inlined_call_operand.hbm [shape: bf16[2,32,32], index: 4, kind: input, shape index: {}]
  %s5 = inlined_call_operand.hbm [shape: bf16[2,32,32], index: 5, kind: input, shape index: {}]
  %s6 = inlined_call_operand.hbm [shape: bf16[2,32,32], index: 6, kind: input, shape index: {}]
  %s7 = inlined_call_operand.hbm [shape: bf16[2,32,64], index: 7, kind: input, shape index: {}]
  %s8 = inlined_call_operand.hbm [shape: bf16[2,64,32], index: 8, kind: input, shape index: {}]
  %s9 = inlined_call_operand.hbm [shape: f32[16,32], index: 9, kind: output, shape index: {}]
  %s10 = sld [smem:[#allocation0]]
  $region113: #{tpu_custom_call.1} parent=0
    _
  %s12 = ssub.s32 1, %s10
  %s13 = scalar_select 0, %s12, %s10
  $region1: #{tpu_custom_call.1} parent=0
    #allocation3 [shape = 'u8[8192]{0}', space=vmem, size = 0x2000, scoped, tag = 'input window, operand 0, single buffered']
    #allocation4 [shape = 's32[2]{0}', space=sflag, size = 0x8, scoped, tag = 'scoped memory for tpu_custom_call.1']
    #allocation5 [shape = 's32[2]{0}', space=sflag, size = 0x8, scoped, tag = 'scoped memory for tpu_custom_call.1']
    #allocation6 [shape = 'u8[16384]{0}', space=vmem, size = 0x4000, scoped, tag = 'input window, operand 1']
    #allocation7 [shape = 's32[2]{0}', space=sflag, size = 0x8, scoped, tag = 'scoped memory for tpu_custom_call.1']
    #allocation8 [shape = 'u8[1024]{0}', space=vmem, size = 0x400, scoped, tag = 'input window, operand 2']
    #allocation9 [shape = 'u8[16384]{0}', space=vmem, size = 0x4000, scoped, tag = 'input window, operand 3']
    #allocation10 [shape = 's32[2]{0}', space=sflag, size = 0x8, scoped, tag = 'scoped memory for tpu_custom_call.1']
    #allocation11 [shape = 'u8[16384]{0}', space=vmem, size = 0x4000, scoped, tag = 'input window, operand 4']
    #allocation12 [shape = 'u8[16384]{0}', space=vmem, size = 0x4000, scoped, tag = 'input window, operand 5']
    #allocation13 [shape = 's32[2]{0}', space=sflag, size = 0x8, scoped, tag = 'scoped memory for tpu_custom_call.1']
    #allocation14 [shape = 'u8[16384]{0}', space=vmem, size = 0x4000, scoped, tag = 'input window, operand 6']
    #allocation15 [shape = 'u8[16384]{0}', space=vmem, size = 0x4000, scoped, tag = 'input window, operand 7']
    #allocation16 [shape = 's32[2]{0}', space=sflag, size = 0x8, scoped, tag = 'scoped memory for tpu_custom_call.1']
    #allocation17 [shape = 'u8[32768]{0}', space=vmem, size = 0x8000, scoped, tag = 'input window, operand 8']
    #allocation18 [shape = 'u8[8192]{0}', space=vmem, size = 0x2000, scoped, tag = 'output window, operand 0, single buffered']
    %14 = vsyncpa [#allocation4], 0
    %15 = vsyncpa [#allocation7], 0
    %s16 = scalar_lea.sflag [#allocation7], 1
    %17 = vsyncpa %s16, 0
    %18 = vsyncpa [#allocation10], 0
    %s19 = scalar_lea.sflag [#allocation10], 1
    %20 = vsyncpa %s19, 0
    %21 = vsyncpa [#allocation13], 0
    %s22 = scalar_lea.sflag [#allocation13], 1
    %23 = vsyncpa %s22, 0
    %24 = vsyncpa [#allocation16], 0
    %s25 = scalar_lea.sflag [#allocation16], 1
    %26 = vsyncpa %s25, 0
    %27 = vsyncpa [#allocation5], 0
    loop: start=0, step=1, limit=4
    $region2: #{tpu_custom_call.1} parent=1 // loop_pre_header
      _
    $region3: #{tpu_custom_call.1} parent=1 // loop_header
      %s29 = sphi 0, %s33
      %p30 = scmp.ge.s32.totalorder %s29, 4
      %s37 = sphi 0, %s37
      %s39 = sphi 0, %s37
      %s40 = sphi 0, %s39
      %s54 = sphi 0, %s40
      %s60 = sphi 0, %s62
      %s63 = sphi 0, %s60
      %s64 = sphi 0, %s63
      %s80 = sphi 0, %s64
      %s86 = sphi 0, %s88
      %s89 = sphi 0, %s86
      %s90 = sphi 0, %s89
      %s106 = sphi 0, %s90
      %s112 = sphi 0, %s114
      %s115 = sphi 0, %s112
      %s116 = sphi 0, %s115
      %s132 = sphi 0, %s116
      %s138 = sphi 0, %s140
      %s141 = sphi 0, %s138
      %s142 = sphi 0, %s141
      %s158 = sphi 0, %s142
      %s164 = sphi 0, %s166
      %s167 = sphi 0, %s164
      %s168 = sphi 0, %s167
      %s184 = sphi 0, %s168
      %s190 = sphi 0, %s192
      %s193 = sphi 0, %s190
      %s194 = sphi 0, %s193
      %s210 = sphi 0, %s194
      %s216 = sphi 0, %s218
      %s219 = sphi 0, %s216
      %s220 = sphi 0, %s219
      %s236 = sphi 0, %s220
      %s242 = sphi 0, %s244
      %s245 = sphi 0, %s242
      %s246 = sphi 0, %s245
      %s262 = sphi 0, %s246
      %s266 = sphi 0, %s266
      %s268 = sphi 0, %s266
      %s269 = sphi 0, %s268
      %s283 = sphi 0, %s269
    $region4: #{tpu_custom_call.1} parent=1 // loop_header_branch
      %32 = sbr.rel (%p30) target = $region8
    $region5: #{tpu_custom_call.1} parent=1 // loop_body
      %s34 = ssub.s32 %s29, 1
      %s35 = ssub.s32 %s29, 2
      %s36 = sadd.s32 %s29, 1
      %s38 = sadd.s32 %s37, 1
      %p41 = scmp.eq.s32.totalorder %s29, 1
      %p42 = scmp.ne.s32.totalorder %s37, %s39
      %p43 = scmp.eq.s32.totalorder %s29, 0
      %p44 = por %p42, %p43
      %p45 = scmp.ne.s32.totalorder %s37, %s39
      %p46 = scmp.eq.s32.totalorder %s34, 1
      %p47 = por %p45, %p46
      %p48 = scmp.ne.s32.totalorder %s39, %s40
      %p49 = scmp.eq.s32.totalorder %s34, 0
      %p50 = por %p48, %p49
      %p51 = scmp.ne.s32.totalorder %s39, %s40
      %p52 = scmp.eq.s32.totalorder %s35, 1
      %p53 = por %p51, %p52
      %p55 = scmp.ne.s32.totalorder %s40, %s54
      %p56 = scmp.eq.s32.totalorder %s35, 0
      %p57 = por %p55, %p56
      %s58 = ssub.s32 %s29, %s36
      %p59 = scmp.eq.s32.totalorder %s58, 0
      %s61 = sadd.s32 %s60, 1
      %s62 = scalar_select %p59, %s60, %s61
      %p65 = pneg %p59
      %p66 = scmp.eq.s32.totalorder %s29, 1
      %p67 = por %p65, %p66
      %p68 = scmp.ne.s32.totalorder %s60, %s63
      %p69 = scmp.eq.s32.totalorder %s29, 0
      %p70 = por %p68, %p69
      %p71 = scmp.ne.s32.totalorder %s60, %s63
      %p72 = scmp.eq.s32.totalorder %s34, 1
      %p73 = por %p71, %p72
      %p74 = scmp.ne.s32.totalorder %s63, %s64
      %p75 = scmp.eq.s32.totalorder %s34, 0
      %p76 = por %p74, %p75
      %p77 = scmp.ne.s32.totalorder %s63, %s64
      %p78 = scmp.eq.s32.totalorder %s35, 1
      %p79 = por %p77, %p78
      %p81 = scmp.ne.s32.totalorder %s64, %s80
      %p82 = scmp.eq.s32.totalorder %s35, 0
      %p83 = por %p81, %p82
      %s84 = ssub.s32 %s29, %s36
      %p85 = scmp.eq.s32.totalorder %s84, 0
      %s87 = sadd.s32 %s86, 1
      %s88 = scalar_select %p85, %s86, %s87
      %p91 = pneg %p85
      %p92 = scmp.eq.s32.totalorder %s29, 1
      %p93 = por %p91, %p92
      %p94 = scmp.ne.s32.totalorder %s86, %s89
      %p95 = scmp.eq.s32.totalorder %s29, 0
      %p96 = por %p94, %p95
      %p97 = scmp.ne.s32.totalorder %s86, %s89
      %p98 = scmp.eq.s32.totalorder %s34, 1
      %p99 = por %p97, %p98
      %p100 = scmp.ne.s32.totalorder %s89, %s90
      %p101 = scmp.eq.s32.totalorder %s34, 0
      %p102 = por %p100, %p101
      %p103 = scmp.ne.s32.totalorder %s89, %s90
      %p104 = scmp.eq.s32.totalorder %s35, 1
      %p105 = por %p103, %p104
      %p107 = scmp.ne.s32.totalorder %s90, %s106
      %p108 = scmp.eq.s32.totalorder %s35, 0
      %p109 = por %p107, %p108
      %s110 = ssub.s32 %s29, %s36
      %p111 = scmp.eq.s32.totalorder %s110, 0
      %s113 = sadd.s32 %s112, 1
      %s114 = scalar_select %p111, %s112, %s113
      %p117 = pneg %p111
      %p118 = scmp.eq.s32.totalorder %s29, 1
      %p119 = por %p117, %p118
      %p120 = scmp.ne.s32.totalorder %s112, %s115
      %p121 = scmp.eq.s32.totalorder %s29, 0
      %p122 = por %p120, %p121
      %p123 = scmp.ne.s32.totalorder %s112, %s115
      %p124 = scmp.eq.s32.totalorder %s34, 1
      %p125 = por %p123, %p124
      %p126 = scmp.ne.s32.totalorder %s115, %s116
      %p127 = scmp.eq.s32.totalorder %s34, 0
      %p128 = por %p126, %p127
      %p129 = scmp.ne.s32.totalorder %s115, %s116
      %p130 = scmp.eq.s32.totalorder %s35, 1
      %p131 = por %p129, %p130
      %p133 = scmp.ne.s32.totalorder %s116, %s132
      %p134 = scmp.eq.s32.totalorder %s35, 0
      %p135 = por %p133, %p134
      %s136 = ssub.s32 %s29, %s36
      %p137 = scmp.eq.s32.totalorder %s136, 0
      %s139 = sadd.s32 %s138, 1
      %s140 = scalar_select %p137, %s138, %s139
      %p143 = pneg %p137
      %p144 = scmp.eq.s32.totalorder %s29, 1
      %p145 = por %p143, %p144
      %p146 = scmp.ne.s32.totalorder %s138, %s141
      %p147 = scmp.eq.s32.totalorder %s29, 0
      %p148 = por %p146, %p147
      %p149 = scmp.ne.s32.totalorder %s138, %s141
      %p150 = scmp.eq.s32.totalorder %s34, 1
      %p151 = por %p149, %p150
      %p152 = scmp.ne.s32.totalorder %s141, %s142
      %p153 = scmp.eq.s32.totalorder %s34, 0
      %p154 = por %p152, %p153
      %p155 = scmp.ne.s32.totalorder %s141, %s142
      %p156 = scmp.eq.s32.totalorder %s35, 1
      %p157 = por %p155, %p156
      %p159 = scmp.ne.s32.totalorder %s142, %s158
      %p160 = scmp.eq.s32.totalorder %s35, 0
      %p161 = por %p159, %p160
      %s162 = ssub.s32 %s29, %s36
      %p163 = scmp.eq.s32.totalorder %s162, 0
      %s165 = sadd.s32 %s164, 1
      %s166 = scalar_select %p163, %s164, %s165
      %p169 = pneg %p163
      %p170 = scmp.eq.s32.totalorder %s29, 1
      %p171 = por %p169, %p170
      %p172 = scmp.ne.s32.totalorder %s164, %s167
      %p173 = scmp.eq.s32.totalorder %s29, 0
      %p174 = por %p172, %p173
      %p175 = scmp.ne.s32.totalorder %s164, %s167
      %p176 = scmp.eq.s32.totalorder %s34, 1
      %p177 = por %p175, %p176
      %p178 = scmp.ne.s32.totalorder %s167, %s168
      %p179 = scmp.eq.s32.totalorder %s34, 0
      %p180 = por %p178, %p179
      %p181 = scmp.ne.s32.totalorder %s167, %s168
      %p182 = scmp.eq.s32.totalorder %s35, 1
      %p183 = por %p181, %p182
      %p185 = scmp.ne.s32.totalorder %s168, %s184
      %p186 = scmp.eq.s32.totalorder %s35, 0
      %p187 = por %p185, %p186
      %s188 = ssub.s32 %s29, %s36
      %p189 = scmp.eq.s32.totalorder %s188, 0
      %s191 = sadd.s32 %s190, 1
      %s192 = scalar_select %p189, %s190, %s191
      %p195 = pneg %p189
      %p196 = scmp.eq.s32.totalorder %s29, 1
      %p197 = por %p195, %p196
      %p198 = scmp.ne.s32.totalorder %s190, %s193
      %p199 = scmp.eq.s32.totalorder %s29, 0
      %p200 = por %p198, %p199
      %p201 = scmp.ne.s32.totalorder %s190, %s193
      %p202 = scmp.eq.s32.totalorder %s34, 1
      %p203 = por %p201, %p202
      %p204 = scmp.ne.s32.totalorder %s193, %s194
      %p205 = scmp.eq.s32.totalorder %s34, 0
      %p206 = por %p204, %p205
      %p207 = scmp.ne.s32.totalorder %s193, %s194
      %p208 = scmp.eq.s32.totalorder %s35, 1
      %p209 = por %p207, %p208
      %p211 = scmp.ne.s32.totalorder %s194, %s210
      %p212 = scmp.eq.s32.totalorder %s35, 0
      %p213 = por %p211, %p212
      %s214 = ssub.s32 %s29, %s36
      %p215 = scmp.eq.s32.totalorder %s214, 0
      %s217 = sadd.s32 %s216, 1
      %s218 = scalar_select %p215, %s216, %s217
      %p221 = pneg %p215
      %p222 = scmp.eq.s32.totalorder %s29, 1
      %p223 = por %p221, %p222
      %p224 = scmp.ne.s32.totalorder %s216, %s219
      %p225 = scmp.eq.s32.totalorder %s29, 0
      %p226 = por %p224, %p225
      %p227 = scmp.ne.s32.totalorder %s216, %s219
      %p228 = scmp.eq.s32.totalorder %s34, 1
      %p229 = por %p227, %p228
      %p230 = scmp.ne.s32.totalorder %s219, %s220
      %p231 = scmp.eq.s32.totalorder %s34, 0
      %p232 = por %p230, %p231
      %p233 = scmp.ne.s32.totalorder %s219, %s220
      %p234 = scmp.eq.s32.totalorder %s35, 1
      %p235 = por %p233, %p234
      %p237 = scmp.ne.s32.totalorder %s220, %s236
      %p238 = scmp.eq.s32.totalorder %s35, 0
      %p239 = por %p237, %p238
      %s240 = ssub.s32 %s29, %s36
      %p241 = scmp.eq.s32.totalorder %s240, 0
      %s243 = sadd.s32 %s242, 1
      %s244 = scalar_select %p241, %s242, %s243
      %p247 = pneg %p241
      %p248 = scmp.eq.s32.totalorder %s29, 1
      %p249 = por %p247, %p248
      %p250 = scmp.ne.s32.totalorder %s242, %s245
      %p251 = scmp.eq.s32.totalorder %s29, 0
      %p252 = por %p250, %p251
      %p253 = scmp.ne.s32.totalorder %s242, %s245
      %p254 = scmp.eq.s32.totalorder %s34, 1
      %p255 = por %p253, %p254
      %p256 = scmp.ne.s32.totalorder %s245, %s246
      %p257 = scmp.eq.s32.totalorder %s34, 0
      %p258 = por %p256, %p257
      %p259 = scmp.ne.s32.totalorder %s245, %s246
      %p260 = scmp.eq.s32.totalorder %s35, 1
      %p261 = por %p259, %p260
      %p263 = scmp.ne.s32.totalorder %s246, %s262
      %p264 = scmp.eq.s32.totalorder %s35, 0
      %p265 = por %p263, %p264
      %s267 = sadd.s32 %s266, 1
      %p270 = scmp.eq.s32.totalorder %s29, 1
      %p271 = scmp.ne.s32.totalorder %s266, %s268
      %p272 = scmp.eq.s32.totalorder %s29, 0
      %p273 = por %p271, %p272
      %p274 = scmp.ne.s32.totalorder %s266, %s268
      %p275 = scmp.eq.s32.totalorder %s34, 1
      %p276 = por %p274, %p275
      %p277 = scmp.ne.s32.totalorder %s268, %s269
      %p278 = scmp.eq.s32.totalorder %s34, 0
      %p279 = por %p277, %p278
      %p280 = scmp.ne.s32.totalorder %s268, %s269
      %p281 = scmp.eq.s32.totalorder %s35, 1
      %p282 = por %p280, %p281
      %p284 = scmp.ne.s32.totalorder %s269, %s283
      %p285 = scmp.eq.s32.totalorder %s35, 0
      %p286 = por %p284, %p285
      %p287 = scmp.le.s32.totalorder 1, %s29
      %p288 = scmp.lt.s32.totalorder %s29, 3
      %p289 = pnand %p287, %p288
      %p290 = pneg %p289
      // Predicated region
      $region9: #{tpu_custom_call.1} parent=5 // pred_check
        _
      $region10: #{tpu_custom_call.1} parent=5 // pred_check_branch
        %292 = sbr.rel (%p289) target = $region12
      $region11: #{tpu_custom_call.1} parent=5 // pred_region
        %s293 = ssub.s32 %s29, 1
        // Predicated region
        $region13: #{tpu_custom_call.1} parent=11 // pred_check
          %p294 = pneg %p50
        $region14: #{tpu_custom_call.1} parent=11 // pred_check_branch
          %296 = sbr.rel (%p294) target = $region16
        $region15: #{tpu_custom_call.1} parent=11 // pred_region
          %s298 = ssub.s32 256, 256
          %299 = vsyncadd [#allocation4], %s298
          %s300 = sshll.u32 [#allocation3], 4
          %s301 = int_to_ptr.vmem [resolvable:$true] %s300
          %306 = dma.hbm_to_vmem [thread:$0]  %s0, 256, %s301, [#allocation4], 128, 128, 8
        $region16: #{tpu_custom_call.1} parent=11 // pred_fallthru
          _
      $region12: #{tpu_custom_call.1} parent=5 // pred_fallthru
        _
      %p307 = scmp.lt.s32.totalorder %s29, 2
      // Predicated region
      $region17: #{tpu_custom_call.1} parent=5 // pred_check
        %p308 = pneg %p307
      $region18: #{tpu_custom_call.1} parent=5 // pred_check_branch
        %310 = sbr.rel (%p308) target = $region20
      $region19: #{tpu_custom_call.1} parent=5 // pred_region
        // Predicated region
        $region21: #{tpu_custom_call.1} parent=19 // pred_check
          %p311 = pneg %p70
        $region22: #{tpu_custom_call.1} parent=19 // pred_check_branch
          %313 = sbr.rel (%p311) target = $region24
        $region23: #{tpu_custom_call.1} parent=19 // pred_region
          %s314 = sand.u32 %s29, 1
          %s315 = scalar_lea.sflag [#allocation7], %s314
          %s316 = sand.u32 %s60, 1
          %s317 = smul.addr %s316, 16
          %s318 = scalar_lea.vmem [#allocation6], %s317
          %s320 = ssub.s32 256, 256
          %321 = vsyncadd %s315, %s320
          %s322 = smul.addr %s29, 2
          %s323 = smul.addr %s322, 128
          %s324 = scalar_lea.hbm %s1, %s323
          %s325 = sshll.u32 %s318, 4
          %s326 = int_to_ptr.vmem [resolvable:$true] %s325
          %331 = dma.hbm_to_vmem [thread:$0]  %s324, 256, %s326, %s315, 128, 128, 8
        $region24: #{tpu_custom_call.1} parent=19 // pred_fallthru
          _
        // Predicated region
        $region25: #{tpu_custom_call.1} parent=19 // pred_check
          %p332 = pneg %p96
        $region26: #{tpu_custom_call.1} parent=19 // pred_check_branch
          %334 = sbr.rel (%p332) target = $region28
        $region27: #{tpu_custom_call.1} parent=19 // pred_region
          %s335 = sand.u32 %s29, 1
          %s336 = scalar_lea.sflag [#allocation7], %s335
          %s337 = sand.u32 %s86, 1
          %s338 = scalar_lea.vmem [#allocation8], %s337
          %s340 = ssub.s32 16, 16
          %341 = vsyncadd %s336, %s340
          %s342 = smul.addr %s29, 16
          %s343 = scalar_lea.hbm %s2, %s342
          %s345 = sshll.u32 %s338, 4
          %s346 = int_to_ptr.vmem [resolvable:$true] %s345
          %348 = dma.hbm_to_vmem [thread:$0]  %s343, 16, %s346, %s336
        $region28: #{tpu_custom_call.1} parent=19 // pred_fallthru
          _
        // Predicated region
        $region29: #{tpu_custom_call.1} parent=19 // pred_check
          %p349 = pneg %p122
        $region30: #{tpu_custom_call.1} parent=19 // pred_check_branch
          %351 = sbr.rel (%p349) target = $region32
        $region31: #{tpu_custom_call.1} parent=19 // pred_region
          %s352 = sand.u32 %s29, 1
          %s353 = scalar_lea.sflag [#allocation10], %s352
          %s354 = sand.u32 %s112, 1
          %s355 = smul.addr %s354, 16
          %s356 = scalar_lea.vmem [#allocation9], %s355
          %s358 = ssub.s32 256, 256
          %359 = vsyncadd %s353, %s358
          %s360 = smul.addr %s29, 4
          %s361 = smul.addr %s360, 64
          %s362 = scalar_lea.hbm %s3, %s361
          %s363 = sshll.u32 %s356, 4
          %s364 = int_to_ptr.vmem [resolvable:$true] %s363
          %369 = dma.hbm_to_vmem [thread:$0]  %s362, 256, %s364, %s353, 64, 64, 4
        $region32: #{tpu_custom_call.1} parent=19 // pred_fallthru
          _
        // Predicated region
        $region33: #{tpu_custom_call.1} parent=19 // pred_check
          %p370 = pneg %p148
        $region34: #{tpu_custom_call.1} parent=19 // pred_check_branch
          %372 = sbr.rel (%p370) target = $region36
        $region35: #{tpu_custom_call.1} parent=19 // pred_region
          %s373 = sand.u32 %s29, 1
          %s374 = scalar_lea.sflag [#allocation10], %s373
          %s375 = sand.u32 %s138, 1
          %s376 = smul.addr %s375, 16
          %s377 = scalar_lea.vmem [#allocation11], %s376
          %s379 = ssub.s32 256, 256
          %380 = vsyncadd %s374, %s379
          %s381 = smul.addr %s29, 4
          %s382 = smul.addr %s381, 64
          %s383 = scalar_lea.hbm %s4, %s382
          %s384 = sshll.u32 %s377, 4
          %s385 = int_to_ptr.vmem [resolvable:$true] %s384
          %390 = dma.hbm_to_vmem [thread:$0]  %s383, 256, %s385, %s374, 64, 64, 4
        $region36: #{tpu_custom_call.1} parent=19 // pred_fallthru
          _
        // Predicated region
        $region37: #{tpu_custom_call.1} parent=19 // pred_check
          %p391 = pneg %p174
        $region38: #{tpu_custom_call.1} parent=19 // pred_check_branch
          %393 = sbr.rel (%p391) target = $region40
        $region39: #{tpu_custom_call.1} parent=19 // pred_region
          %s394 = sand.u32 %s29, 1
          %s395 = scalar_lea.sflag [#allocation13], %s394
          %s396 = sand.u32 %s164, 1
          %s397 = smul.addr %s396, 16
          %s398 = scalar_lea.vmem [#allocation12], %s397
          %s400 = ssub.s32 256, 256
          %401 = vsyncadd %s395, %s400
          %s402 = smul.addr %s29, 4
          %s403 = smul.addr %s402, 64
          %s404 = scalar_lea.hbm %s5, %s403
          %s405 = sshll.u32 %s398, 4
          %s406 = int_to_ptr.vmem [resolvable:$true] %s405
          %411 = dma.hbm_to_vmem [thread:$0]  %s404, 256, %s406, %s395, 64, 64, 4
        $region40: #{tpu_custom_call.1} parent=19 // pred_fallthru
          _
        // Predicated region
        $region41: #{tpu_custom_call.1} parent=19 // pred_check
          %p412 = pneg %p200
        $region42: #{tpu_custom_call.1} parent=19 // pred_check_branch
          %414 = sbr.rel (%p412) target = $region44
        $region43: #{tpu_custom_call.1} parent=19 // pred_region
          %s415 = sand.u32 %s29, 1
          %s416 = scalar_lea.sflag [#allocation13], %s415
          %s417 = sand.u32 %s190, 1
          %s418 = smul.addr %s417, 16
          %s419 = scalar_lea.vmem [#allocation14], %s418
          %s421 = ssub.s32 256, 256
          %422 = vsyncadd %s416, %s421
          %s423 = smul.addr %s29, 4
          %s424 = smul.addr %s423, 64
          %s425 = scalar_lea.hbm %s6, %s424
          %s426 = sshll.u32 %s419, 4
          %s427 = int_to_ptr.vmem [resolvable:$true] %s426
          %432 = dma.hbm_to_vmem [thread:$0]  %s425, 256, %s427, %s416, 64, 64, 4
        $region44: #{tpu_custom_call.1} parent=19 // pred_fallthru
          _
        // Predicated region
        $region45: #{tpu_custom_call.1} parent=19 // pred_check
          %p433 = pneg %p226
        $region46: #{tpu_custom_call.1} parent=19 // pred_check_branch
          %435 = sbr.rel (%p433) target = $region48
        $region47: #{tpu_custom_call.1} parent=19 // pred_region
          %s436 = sand.u32 %s29, 1
          %s437 = scalar_lea.sflag [#allocation16], %s436
          %s438 = sand.u32 %s216, 1
          %s439 = smul.addr %s438, 16
          %s440 = scalar_lea.vmem [#allocation15], %s439
          %s442 = ssub.s32 256, 256
          %443 = vsyncadd %s437, %s442
          %s444 = smul.addr %s29, 4
          %s445 = smul.addr %s444, 64
          %s446 = scalar_lea.hbm %s7, %s445
          %s447 = sshll.u32 %s440, 4
          %s448 = int_to_ptr.vmem [resolvable:$true] %s447
          %453 = dma.hbm_to_vmem [thread:$0]  %s446, 256, %s448, %s437, 64, 64, 4
        $region48: #{tpu_custom_call.1} parent=19 // pred_fallthru
          _
        // Predicated region
        $region49: #{tpu_custom_call.1} parent=19 // pred_check
          %p454 = pneg %p252
        $region50: #{tpu_custom_call.1} parent=19 // pred_check_branch
          %456 = sbr.rel (%p454) target = $region52
        $region51: #{tpu_custom_call.1} parent=19 // pred_region
          %s457 = sand.u32 %s29, 1
          %s458 = scalar_lea.sflag [#allocation16], %s457
          %s459 = sand.u32 %s242, 1
          %s460 = smul.addr %s459, 32
          %s461 = scalar_lea.vmem [#allocation17], %s460
          %s463 = ssub.s32 512, 512
          %464 = vsyncadd %s458, %s463
          %s465 = smul.addr %s29, 8
          %s466 = smul.addr %s465, 64
          %s467 = scalar_lea.hbm %s8, %s466
          %s468 = sshll.u32 %s461, 4
          %s469 = int_to_ptr.vmem [resolvable:$true] %s468
          %474 = dma.hbm_to_vmem [thread:$0]  %s467, 512, %s469, %s458, 64, 64, 4
        $region52: #{tpu_custom_call.1} parent=19 // pred_fallthru
          _
      $region20: #{tpu_custom_call.1} parent=5 // pred_fallthru
        _
      %p475 = scmp.le.s32.totalorder 1, %s29
      %p476 = scmp.lt.s32.totalorder %s29, 3
      %p477 = pnand %p475, %p476
      %p478 = pneg %p477
      // Predicated region
      $region53: #{tpu_custom_call.1} parent=5 // pred_check
        _
      $region54: #{tpu_custom_call.1} parent=5 // pred_check_branch
        %480 = sbr.rel (%p477) target = $region56
      $region55: #{tpu_custom_call.1} parent=5 // pred_region
        %s481 = ssub.s32 %s29, 1
        // Predicated region
        $region57: #{tpu_custom_call.1} parent=55 // pred_check
          %p482 = pneg %p50
        $region58: #{tpu_custom_call.1} parent=55 // pred_check_branch
          %484 = sbr.rel (%p482) target = $region60
        $region59: #{tpu_custom_call.1} parent=55 // pred_region
          %485 = dma.done [#allocation4], 256
        $region60: #{tpu_custom_call.1} parent=55 // pred_fallthru
          _
        %s486 = sand.u32 %s34, 1
        %s487 = scalar_lea.sflag [#allocation7], %s486
        %s488 = sand.u32 %s63, 1
        %s489 = smul.addr %s488, 16
        %s490 = scalar_lea.vmem [#allocation6], %s489
        // Predicated region
        $region61: #{tpu_custom_call.1} parent=55 // pred_check
          %p491 = pneg %p76
        $region62: #{tpu_custom_call.1} parent=55 // pred_check_branch
          %493 = sbr.rel (%p491) target = $region64
        $region63: #{tpu_custom_call.1} parent=55 // pred_region
          %494 = dma.done %s487, 256
        $region64: #{tpu_custom_call.1} parent=55 // pred_fallthru
          _
        %s495 = sand.u32 %s34, 1
        %s496 = scalar_lea.sflag [#allocation7], %s495
        %s497 = sand.u32 %s89, 1
        %s498 = scalar_lea.vmem [#allocation8], %s497
        // Predicated region
        $region65: #{tpu_custom_call.1} parent=55 // pred_check
          %p499 = pneg %p102
        $region66: #{tpu_custom_call.1} parent=55 // pred_check_branch
          %501 = sbr.rel (%p499) target = $region68
        $region67: #{tpu_custom_call.1} parent=55 // pred_region
          %502 = dma.done %s496, 16
        $region68: #{tpu_custom_call.1} parent=55 // pred_fallthru
          _
        %s503 = sand.u32 %s34, 1
        %s504 = scalar_lea.sflag [#allocation10], %s503
        %s505 = sand.u32 %s115, 1
        %s506 = smul.addr %s505, 16
        %s507 = scalar_lea.vmem [#allocation9], %s506
        // Predicated region
        $region69: #{tpu_custom_call.1} parent=55 // pred_check
          %p508 = pneg %p128
        $region70: #{tpu_custom_call.1} parent=55 // pred_check_branch
          %510 = sbr.rel (%p508) target = $region72
        $region71: #{tpu_custom_call.1} parent=55 // pred_region
          %511 = dma.done %s504, 256
        $region72: #{tpu_custom_call.1} parent=55 // pred_fallthru
          _
        %s512 = sand.u32 %s34, 1
        %s513 = scalar_lea.sflag [#allocation10], %s512
        %s514 = sand.u32 %s141, 1
        %s515 = smul.addr %s514, 16
        %s516 = scalar_lea.vmem [#allocation11], %s515
        // Predicated region
        $region73: #{tpu_custom_call.1} parent=55 // pred_check
          %p517 = pneg %p154
        $region74: #{tpu_custom_call.1} parent=55 // pred_check_branch
          %519 = sbr.rel (%p517) target = $region76
        $region75: #{tpu_custom_call.1} parent=55 // pred_region
          %520 = dma.done %s513, 256
        $region76: #{tpu_custom_call.1} parent=55 // pred_fallthru
          _
        %s521 = sand.u32 %s34, 1
        %s522 = scalar_lea.sflag [#allocation13], %s521
        %s523 = sand.u32 %s167, 1
        %s524 = smul.addr %s523, 16
        %s525 = scalar_lea.vmem [#allocation12], %s524
        // Predicated region
        $region77: #{tpu_custom_call.1} parent=55 // pred_check
          %p526 = pneg %p180
        $region78: #{tpu_custom_call.1} parent=55 // pred_check_branch
          %528 = sbr.rel (%p526) target = $region80
        $region79: #{tpu_custom_call.1} parent=55 // pred_region
          %529 = dma.done %s522, 256
        $region80: #{tpu_custom_call.1} parent=55 // pred_fallthru
          _
        %s530 = sand.u32 %s34, 1
        %s531 = scalar_lea.sflag [#allocation13], %s530
        %s532 = sand.u32 %s193, 1
        %s533 = smul.addr %s532, 16
        %s534 = scalar_lea.vmem [#allocation14], %s533
        // Predicated region
        $region81: #{tpu_custom_call.1} parent=55 // pred_check
          %p535 = pneg %p206
        $region82: #{tpu_custom_call.1} parent=55 // pred_check_branch
          %537 = sbr.rel (%p535) target = $region84
        $region83: #{tpu_custom_call.1} parent=55 // pred_region
          %538 = dma.done %s531, 256
        $region84: #{tpu_custom_call.1} parent=55 // pred_fallthru
          _
        %s539 = sand.u32 %s34, 1
        %s540 = scalar_lea.sflag [#allocation16], %s539
        %s541 = sand.u32 %s219, 1
        %s542 = smul.addr %s541, 16
        %s543 = scalar_lea.vmem [#allocation15], %s542
        // Predicated region
        $region85: #{tpu_custom_call.1} parent=55 // pred_check
          %p544 = pneg %p232
        $region86: #{tpu_custom_call.1} parent=55 // pred_check_branch
          %546 = sbr.rel (%p544) target = $region88
        $region87: #{tpu_custom_call.1} parent=55 // pred_region
          %547 = dma.done %s540, 256
        $region88: #{tpu_custom_call.1} parent=55 // pred_fallthru
          _
        %s548 = sand.u32 %s34, 1
        %s549 = scalar_lea.sflag [#allocation16], %s548
        %s550 = sand.u32 %s245, 1
        %s551 = smul.addr %s550, 32
        %s552 = scalar_lea.vmem [#allocation17], %s551
        // Predicated region
        $region89: #{tpu_custom_call.1} parent=55 // pred_check
          %p553 = pneg %p258
        $region90: #{tpu_custom_call.1} parent=55 // pred_check_branch
          %555 = sbr.rel (%p553) target = $region92
        $region91: #{tpu_custom_call.1} parent=55 // pred_region
          %556 = dma.done %s549, 512
        $region92: #{tpu_custom_call.1} parent=55 // pred_fallthru
          _
        %p557 = pneg %p50
        %p558 = pneg %p47
        %s559 = sand.u32 %s34, 1
        %s560 = scalar_lea.sflag [#allocation7], %s559
        %s561 = sand.u32 %s63, 1
        %s562 = smul.addr %s561, 16
        %s563 = scalar_lea.vmem [#allocation6], %s562
        %p564 = pneg %p76
        %p565 = pneg %p73
        %s566 = sand.u32 %s34, 1
        %s567 = scalar_lea.sflag [#allocation7], %s566
        %s568 = sand.u32 %s89, 1
        %s569 = scalar_lea.vmem [#allocation8], %s568
        %p570 = pneg %p102
        %p571 = pneg %p99
        %s572 = sand.u32 %s34, 1
        %s573 = scalar_lea.sflag [#allocation10], %s572
        %s574 = sand.u32 %s115, 1
        %s575 = smul.addr %s574, 16
        %s576 = scalar_lea.vmem [#allocation9], %s575
        %p577 = pneg %p128
        %p578 = pneg %p125
        %s579 = sand.u32 %s34, 1
        %s580 = scalar_lea.sflag [#allocation10], %s579
        %s581 = sand.u32 %s141, 1
        %s582 = smul.addr %s581, 16
        %s583 = scalar_lea.vmem [#allocation11], %s582
        %p584 = pneg %p154
        %p585 = pneg %p151
        %s586 = sand.u32 %s34, 1
        %s587 = scalar_lea.sflag [#allocation13], %s586
        %s588 = sand.u32 %s167, 1
        %s589 = smul.addr %s588, 16
        %s590 = scalar_lea.vmem [#allocation12], %s589
        %p591 = pneg %p180
        %p592 = pneg %p177
        %s593 = sand.u32 %s34, 1
        %s594 = scalar_lea.sflag [#allocation13], %s593
        %s595 = sand.u32 %s193, 1
        %s596 = smul.addr %s595, 16
        %s597 = scalar_lea.vmem [#allocation14], %s596
        %p598 = pneg %p206
        %p599 = pneg %p203
        %s600 = sand.u32 %s34, 1
        %s601 = scalar_lea.sflag [#allocation16], %s600
        %s602 = sand.u32 %s219, 1
        %s603 = smul.addr %s602, 16
        %s604 = scalar_lea.vmem [#allocation15], %s603
        %p605 = pneg %p232
        %p606 = pneg %p229
        %s607 = sand.u32 %s34, 1
        %s608 = scalar_lea.sflag [#allocation16], %s607
        %s609 = sand.u32 %s245, 1
        %s610 = smul.addr %s609, 32
        %s611 = scalar_lea.vmem [#allocation17], %s610
        %p612 = pneg %p258
        %p613 = pneg %p255
        %p614 = pneg %p279
        %p615 = pneg %p276
        %p617 = scmp.eq.s32.totalorder %s34, 0
        // Predicated region
        $region93: #{tpu_custom_call.1} parent=55 // pred_check
          %p618 = pneg %p617
        $region94: #{tpu_custom_call.1} parent=55 // pred_check_branch
          %620 = sbr.rel (%p618) target = $region96
        $region95: #{tpu_custom_call.1} parent=55 // pred_region
          %v621 = vld [vmem:[#allocation3] sm:$0xff]
          %v622 = vld [vmem:[#allocation3 + $0x8] sm:$0xff]
          %vm623 = vcmask 261120
          %624 = vst.msk [vmem:[#allocation2] sm:$0xff] %vm623, %v621
          %625 = vst.msk [vmem:[#allocation2 + $0x8] sm:$0xff] %vm623, %v622
        $region96: #{tpu_custom_call.1} parent=55 // pred_fallthru
          _
        %v626 = vld [vmem:[#allocation2] sm:$0xff]
        %v627 = vld [vmem:[#allocation2 + $0x8] sm:$0xff]
        %v628 = vld [vmem:[%s490] sm:$0xff]
        %v629 = vld [vmem:[%s490 + $0x8] sm:$0x1]
        %v630 = vld [vmem:[%s498] sm:$0x1]
        %vm631 = vcmask 261120
        %v632 = vsel %vm631, %v626, 0.0
        %633 = vadd.xlane.f32.xlu0 %v632
        %v634 = vpop.xlane.xlu0 %633
        %v635 = vsel %vm631, %v627, 0.0
        %636 = vadd.xlane.f32.xlu0 %v635
        %v637 = vpop.xlane.xlu0 %636
        %v638 = vrcp.pop 32.0
        %v639 = vmul.f32 %v634, %v638
        %v640 = vmul.f32 %v637, %v638
        %v641 = vsub.f32 %v626, %v639
        %v642 = vsub.f32 %v627, %v640
        %v643 = vmul.f32 %v641, %v641
        %v644 = vmul.f32 %v642, %v642
        %v645 = vsel %vm631, %v643, 0.0
        %646 = vadd.xlane.f32.xlu0 %v645
        %v647 = vpop.xlane.xlu0 %646
        %v648 = vsel %vm631, %v644, 0.0
        %649 = vadd.xlane.f32.xlu0 %v648
        %v650 = vpop.xlane.xlu0 %649
        %v651 = vmul.f32 %v647, %v638
        %v652 = vmul.f32 %v650, %v638
        %v653 = vadd.f32 %v651, 1e-05
        %v654 = vadd.f32 %v652, 1e-05
        %v655 = vrsqrt.pop %v653
        %v656 = vrsqrt.pop %v654
        %v657 = vmul.f32 %v641, %v655
        %v658 = vmul.f32 %v642, %v656
        %v659 = vlaneseq
        %v660 = vshrl.u32 %v659, 7
        %v661 = vsub.s32 0, %v660
        %v662 = vrot.slane %v628, %v661
        %v663 = vmul.f32 %v657, %v662
        %v664 = vmul.f32 %v658, %v662
        %v665 = vlaneseq
        %v666 = vshrl.u32 %v665, 7
        %v667 = vsub.s32 1, %v666
        %v668 = vrot.slane %v628, %v667
        %v669 = vadd.f32 %v663, %v668
        %v670 = vadd.f32 %v664, %v668
        %v671 = vpack.c.bf16 %v670, %v669
        %v672 = vld [vmem:[%s507] sm:$0xf]
        %v673 = vld [vmem:[%s507 + $0x4] sm:$0xf]
        %v674 = vld [vmem:[%s507 + $0x8] sm:$0xf]
        %v675 = vld [vmem:[%s507 + $0xc] sm:$0xf]
        %v676 = vlaneseq
        %v677 = vshrl.u32 %v676, 7
        %v678 = vsub.s32 2, %v677
        %v679 = vrot.slane %v628, %v678
        %v684 = vunpack.c.l.b16 %v672
        %v685 = vunpack.c.l.b16 %v673
        %v686 = vunpack.c.l.b16 %v674
        %v687 = vunpack.c.l.b16 %v675
        %v688 = vpack.c.b16 %v685, %v684
        %v689 = vpack.c.b16 %v687, %v686
        %v693 = vsel %vm631, %v671, 0
        %695 = vmatprep.subr.bf16.mxu0 0
        %696 = vmatpush1.bf16.msra.mxu0 %v688
        %697 = vmatprep.subr.bf16.mxu0 0
        %698 = vmatpush1.bf16.msra.mxu0 %v689
        %699 = vmatprep.subr.bf16.mxu0 0
        %700 = vmatpush1.bf16.msra.mxu0 0
        %701 = vmatprep.subr.bf16.mxu0 0
        %702 = vmatpush1.bf16.msra.mxu0 0
        %703 = vmatprep.subr.bf16.mxu0 0
        %704 = vmatpush1.bf16.msra.mxu0 0
        %705 = vmatprep.subr.bf16.mxu0 0
        %706 = vmatpush1.bf16.msra.mxu0 0
        %707 = vmatprep.subr.bf16.mxu0 0
        %708 = vmatpush1.bf16.msra.mxu0 0
        %709 = vmatprep.subr.bf16.mxu0 0
        %710 = vmatpush1.bf16.msra.mxu0 0
        %711 = vmatprep.subr.bf16.mxu0 0
        %712 = vmatpush1.bf16.msra.mxu0 0
        %713 = vmatprep.subr.bf16.mxu0 0
        %714 = vmatpush1.bf16.msra.mxu0 0
        %715 = vmatprep.subr.bf16.mxu0 0
        %716 = vmatpush1.bf16.msra.mxu0 0
        %717 = vmatprep.subr.bf16.mxu0 0
        %718 = vmatpush1.bf16.msra.mxu0 0
        %719 = vmatprep.subr.bf16.mxu0 0
        %720 = vmatpush1.bf16.msra.mxu0 0
        %721 = vmatprep.subr.bf16.mxu0 0
        %722 = vmatpush1.bf16.msra.mxu0 0
        %723 = vmatprep.subr.bf16.mxu0 0
        %724 = vmatpush1.bf16.msra.mxu0 0
        %725 = vmatprep.subr.bf16.mxu0 0
        %726 = vmatpush1.bf16.msra.mxu0 0
        %727 = vmatprep.mubr.bf16.mxu0 0
        %728 = vmatmul.mubr.bf16.gmra.mrb[0].mxu0 %v693
        %v729 = vpop.f32.mrb[0].mxu0
        %v730 = vadd.f32 %v679, %v729
        %v731 = vpop.f32.mrb[0].mxu0
        %v732 = vpop.f32.mrb[0].mxu0
        %v733 = vadd.f32 %v679, %v732
        %v734 = vpop.f32.mrb[0].mxu0
        %735 = vdwg.mxu0
        %v736 = vld [vmem:[%s516] sm:$0xf]
        %v737 = vld [vmem:[%s516 + $0x4] sm:$0xf]
        %v738 = vld [vmem:[%s516 + $0x8] sm:$0xf]
        %v739 = vld [vmem:[%s516 + $0xc] sm:$0xf]
        %v740 = vlaneseq
        %v741 = vshrl.u32 %v740, 7
        %v742 = vsub.s32 3, %v741
        %v743 = vrot.slane %v628, %v742
        %v748 = vunpack.c.l.b16 %v736
        %v749 = vunpack.c.l.b16 %v737
        %v750 = vunpack.c.l.b16 %v738
        %v751 = vunpack.c.l.b16 %v739
        %v752 = vpack.c.b16 %v749, %v748
        %v753 = vpack.c.b16 %v751, %v750
        %756 = vmatprep.subr.bf16.mxu0 0
        %757 = vmatpush1.bf16.msra.mxu0 %v752
        %758 = vmatprep.subr.bf16.mxu0 0
        %759 = vmatpush1.bf16.msra.mxu0 %v753
        %760 = vmatprep.subr.bf16.mxu0 0
        %761 = vmatpush1.bf16.msra.mxu0 0
        %762 = vmatprep.subr.bf16.mxu0 0
        %763 = vmatpush1.bf16.msra.mxu0 0
        %764 = vmatprep.subr.bf16.mxu0 0
        %765 = vmatpush1.bf16.msra.mxu0 0
        %766 = vmatprep.subr.bf16.mxu0 0
        %767 = vmatpush1.bf16.msra.mxu0 0
        %768 = vmatprep.subr.bf16.mxu0 0
        %769 = vmatpush1.bf16.msra.mxu0 0
        %770 = vmatprep.subr.bf16.mxu0 0
        %771 = vmatpush1.bf16.msra.mxu0 0
        %772 = vmatprep.subr.bf16.mxu0 0
        %773 = vmatpush1.bf16.msra.mxu0 0
        %774 = vmatprep.subr.bf16.mxu0 0
        %775 = vmatpush1.bf16.msra.mxu0 0
        %776 = vmatprep.subr.bf16.mxu0 0
        %777 = vmatpush1.bf16.msra.mxu0 0
        %778 = vmatprep.subr.bf16.mxu0 0
        %779 = vmatpush1.bf16.msra.mxu0 0
        %780 = vmatprep.subr.bf16.mxu0 0
        %781 = vmatpush1.bf16.msra.mxu0 0
        %782 = vmatprep.subr.bf16.mxu0 0
        %783 = vmatpush1.bf16.msra.mxu0 0
        %784 = vmatprep.subr.bf16.mxu0 0
        %785 = vmatpush1.bf16.msra.mxu0 0
        %786 = vmatprep.subr.bf16.mxu0 0
        %787 = vmatpush1.bf16.msra.mxu0 0
        %788 = vmatprep.mubr.bf16.mxu0 0
        %789 = vmatmul.mubr.bf16.gmra.mrb[0].mxu0 %v693
        %v790 = vpop.f32.mrb[0].mxu0
        %v791 = vadd.f32 %v743, %v790
        %v792 = vpop.f32.mrb[0].mxu0
        %v793 = vpop.f32.mrb[0].mxu0
        %v794 = vadd.f32 %v743, %v793
        %v795 = vpop.f32.mrb[0].mxu0
        %796 = vdwg.mxu0
        %v797 = vld [vmem:[%s525] sm:$0xf]
        %v798 = vld [vmem:[%s525 + $0x4] sm:$0xf]
        %v799 = vld [vmem:[%s525 + $0x8] sm:$0xf]
        %v800 = vld [vmem:[%s525 + $0xc] sm:$0xf]
        %v801 = vlaneseq
        %v802 = vshrl.u32 %v801, 7
        %v803 = vsub.s32 4, %v802
        %v804 = vrot.slane %v628, %v803
        %v809 = vunpack.c.l.b16 %v797
        %v810 = vunpack.c.l.b16 %v798
        %v811 = vunpack.c.l.b16 %v799
        %v812 = vunpack.c.l.b16 %v800
        %v813 = vpack.c.b16 %v810, %v809
        %v814 = vpack.c.b16 %v812, %v811
        %817 = vmatprep.subr.bf16.mxu0 0
        %818 = vmatpush1.bf16.msra.mxu0 %v813
        %819 = vmatprep.subr.bf16.mxu0 0
        %820 = vmatpush1.bf16.msra.mxu0 %v814
        %821 = vmatprep.subr.bf16.mxu0 0
        %822 = vmatpush1.bf16.msra.mxu0 0
        %823 = vmatprep.subr.bf16.mxu0 0
        %824 = vmatpush1.bf16.msra.mxu0 0
        %825 = vmatprep.subr.bf16.mxu0 0
        %826 = vmatpush1.bf16.msra.mxu0 0
        %827 = vmatprep.subr.bf16.mxu0 0
        %828 = vmatpush1.bf16.msra.mxu0 0
        %829 = vmatprep.subr.bf16.mxu0 0
        %830 = vmatpush1.bf16.msra.mxu0 0
        %831 = vmatprep.subr.bf16.mxu0 0
        %832 = vmatpush1.bf16.msra.mxu0 0
        %833 = vmatprep.subr.bf16.mxu0 0
        %834 = vmatpush1.bf16.msra.mxu0 0
        %835 = vmatprep.subr.bf16.mxu0 0
        %836 = vmatpush1.bf16.msra.mxu0 0
        %837 = vmatprep.subr.bf16.mxu0 0
        %838 = vmatpush1.bf16.msra.mxu0 0
        %839 = vmatprep.subr.bf16.mxu0 0
        %840 = vmatpush1.bf16.msra.mxu0 0
        %841 = vmatprep.subr.bf16.mxu0 0
        %842 = vmatpush1.bf16.msra.mxu0 0
        %843 = vmatprep.subr.bf16.mxu0 0
        %844 = vmatpush1.bf16.msra.mxu0 0
        %845 = vmatprep.subr.bf16.mxu0 0
        %846 = vmatpush1.bf16.msra.mxu0 0
        %847 = vmatprep.subr.bf16.mxu0 0
        %848 = vmatpush1.bf16.msra.mxu0 0
        %849 = vmatprep.mubr.bf16.mxu0 0
        %850 = vmatmul.mubr.bf16.gmra.mrb[0].mxu0 %v693
        %v851 = vpop.f32.mrb[0].mxu0
        %v852 = vadd.f32 %v804, %v851
        %v853 = vpop.f32.mrb[0].mxu0
        %v854 = vpop.f32.mrb[0].mxu0
        %v855 = vadd.f32 %v804, %v854
        %v856 = vpop.f32.mrb[0].mxu0
        %857 = vdwg.mxu0
        %v858 = vmul.f32 %v730, 0.35355338
        %v859 = vmul.f32 %v733, 0.35355338
        %v860 = vpack.c.bf16 %v859, %v858
        %v861 = vpack.c.bf16 %v794, %v791
        %v862 = vpack.c.bf16 %v855, %v852
        %vm863 = vcmask 64512
        %v865 = vsel %vm863, %v860, 0
        %v868 = vsel %vm863, %v861, 0
        %870 = vmatprep.subr.bf16.mxu0 0
        %871 = vmatpush1.bf16.xpose.msra.mxu0 %v868
        %872 = vmatprep.subr.bf16.mxu0 0
        %873 = vmatpush1.bf16.xpose.msra.mxu0 0
        %874 = vmatprep.subr.bf16.mxu0 0
        %875 = vmatpush1.bf16.xpose.msra.mxu0 0
        %876 = vmatprep.subr.bf16.mxu0 0
        %877 = vmatpush1.bf16.xpose.msra.mxu0 0
        %878 = vmatprep.subr.bf16.mxu0 0
        %879 = vmatpush1.bf16.xpose.msra.mxu0 0
        %880 = vmatprep.subr.bf16.mxu0 0
        %881 = vmatpush1.bf16.xpose.msra.mxu0 0
        %882 = vmatprep.subr.bf16.mxu0 0
        %883 = vmatpush1.bf16.xpose.msra.mxu0 0
        %884 = vmatprep.subr.bf16.mxu0 0
        %885 = vmatpush1.bf16.xpose.msra.mxu0 0
        %886 = vmatprep.subr.bf16.mxu0 0
        %887 = vmatpush1.bf16.xpose.msra.mxu0 0
        %888 = vmatprep.subr.bf16.mxu0 0
        %889 = vmatpush1.bf16.xpose.msra.mxu0 0
        %890 = vmatprep.subr.bf16.mxu0 0
        %891 = vmatpush1.bf16.xpose.msra.mxu0 0
        %892 = vmatprep.subr.bf16.mxu0 0
        %893 = vmatpush1.bf16.xpose.msra.mxu0 0
        %894 = vmatprep.subr.bf16.mxu0 0
        %895 = vmatpush1.bf16.xpose.msra.mxu0 0
        %896 = vmatprep.subr.bf16.mxu0 0
        %897 = vmatpush1.bf16.xpose.msra.mxu0 0
        %898 = vmatprep.subr.bf16.mxu0 0
        %899 = vmatpush1.bf16.xpose.msra.mxu0 0
        %900 = vmatprep.subr.bf16.mxu0 0
        %901 = vmatpush1.bf16.xpose.msra.mxu0 0
        %902 = vmatprep.mubr.bf16.mxu0 0
        %903 = vmatmul.mubr.bf16.gmra.mrb[0].mxu0 %v865
        %v904 = vpop.f32.mrb[0].mxu0
        %v905 = vadd.f32 0.0, %v904
        %v906 = vpop.f32.mrb[0].mxu0
        %v907 = vpop.f32.mrb[0].mxu0
        %v908 = vpop.f32.mrb[0].mxu0
        %909 = vdwg.mxu0
        %v910 = vsel %vm863, %v905, -inf
        %911 = vmax.xlane.f32.xlu0 %v910
        %v912 = vpop.xlane.xlu0 %911
        %v913 = vsub.f32 %v905, %v912
        %v914 = vmul.f32 %v913, 1.442695
        %v915 = vpow.pop %v914
        %v916 = vsel %vm863, %v915, 0.0
        %917 = vadd.xlane.f32.xlu0 %v916
        %v918 = vpop.xlane.xlu0 %917
        %v919 = vpack.c.bf16 %v915, %v915
        %v921 = vsel %vm863, %v919, 0
        %vm923 = vcmask 1043456
        %v925 = vsel %vm923, %v862, 0
        %927 = vmatprep.subr.bf16.mxu0 0
        %928 = vmatpush1.bf16.msra.mxu0 %v925
        %929 = vmatprep.subr.bf16.mxu0 0
        %930 = vmatpush1.bf16.msra.mxu0 0
        %931 = vmatprep.subr.bf16.mxu0 0
        %932 = vmatpush1.bf16.msra.mxu0 0
        %933 = vmatprep.subr.bf16.mxu0 0
        %934 = vmatpush1.bf16.msra.mxu0 0
        %935 = vmatprep.subr.bf16.mxu0 0
        %936 = vmatpush1.bf16.msra.mxu0 0
        %937 = vmatprep.subr.bf16.mxu0 0
        %938 = vmatpush1.bf16.msra.mxu0 0
        %939 = vmatprep.subr.bf16.mxu0 0
        %940 = vmatpush1.bf16.msra.mxu0 0
        %941 = vmatprep.subr.bf16.mxu0 0
        %942 = vmatpush1.bf16.msra.mxu0 0
        %943 = vmatprep.subr.bf16.mxu0 0
        %944 = vmatpush1.bf16.msra.mxu0 0
        %945 = vmatprep.subr.bf16.mxu0 0
        %946 = vmatpush1.bf16.msra.mxu0 0
        %947 = vmatprep.subr.bf16.mxu0 0
        %948 = vmatpush1.bf16.msra.mxu0 0
        %949 = vmatprep.subr.bf16.mxu0 0
        %950 = vmatpush1.bf16.msra.mxu0 0
        %951 = vmatprep.subr.bf16.mxu0 0
        %952 = vmatpush1.bf16.msra.mxu0 0
        %953 = vmatprep.subr.bf16.mxu0 0
        %954 = vmatpush1.bf16.msra.mxu0 0
        %955 = vmatprep.subr.bf16.mxu0 0
        %956 = vmatpush1.bf16.msra.mxu0 0
        %957 = vmatprep.subr.bf16.mxu0 0
        %958 = vmatpush1.bf16.msra.mxu0 0
        %959 = vmatprep.mubr.bf16.mxu0 0
        %960 = vmatmul.mubr.bf16.gmra.mrb[0].mxu0 %v921
        %v961 = vpop.f32.mrb[0].mxu0
        %v962 = vadd.f32 0.0, %v961
        %v963 = vpop.f32.mrb[0].mxu0
        %v964 = vpop.f32.mrb[0].mxu0
        %v965 = vpop.f32.mrb[0].mxu0
        %966 = vdwg.mxu0
        %v967 = vrcp.pop %v918
        %v968 = vmul.f32 %v962, %v967
        %970 = vrot.lane.b32.xlu0 %v860, 120
        %v971 = vpop.permute.xlu0 %970
        %973 = vrot.lane.b32.xlu0 %v861, 120
        %v974 = vpop.permute.xlu0 %973
        %v976 = vsel %vm863, %v971, 0
        %v979 = vsel %vm863, %v974, 0
        %981 = vmatprep.subr.bf16.mxu0 0
        %982 = vmatpush1.bf16.xpose.msra.mxu0 %v979
        %983 = vmatprep.subr.bf16.mxu0 0
        %984 = vmatpush1.bf16.xpose.msra.mxu0 0
        %985 = vmatprep.subr.bf16.mxu0 0
        %986 = vmatpush1.bf16.xpose.msra.mxu0 0
        %987 = vmatprep.subr.bf16.mxu0 0
        %988 = vmatpush1.bf16.xpose.msra.mxu0 0
        %989 = vmatprep.subr.bf16.mxu0 0
        %990 = vmatpush1.bf16.xpose.msra.mxu0 0
        %991 = vmatprep.subr.bf16.mxu0 0
        %992 = vmatpush1.bf16.xpose.msra.mxu0 0
        %993 = vmatprep.subr.bf16.mxu0 0
        %994 = vmatpush1.bf16.xpose.msra.mxu0 0
        %995 = vmatprep.subr.bf16.mxu0 0
        %996 = vmatpush1.bf16.xpose.msra.mxu0 0
        %997 = vmatprep.subr.bf16.mxu0 0
        %998 = vmatpush1.bf16.xpose.msra.mxu0 0
        %999 = vmatprep.subr.bf16.mxu0 0
        %1000 = vmatpush1.bf16.xpose.msra.mxu0 0
        %1001 = vmatprep.subr.bf16.mxu0 0
        %1002 = vmatpush1.bf16.xpose.msra.mxu0 0
        %1003 = vmatprep.subr.bf16.mxu0 0
        %1004 = vmatpush1.bf16.xpose.msra.mxu0 0
        %1005 = vmatprep.subr.bf16.mxu0 0
        %1006 = vmatpush1.bf16.xpose.msra.mxu0 0
        %1007 = vmatprep.subr.bf16.mxu0 0
        %1008 = vmatpush1.bf16.xpose.msra.mxu0 0
        %1009 = vmatprep.subr.bf16.mxu0 0
        %1010 = vmatpush1.bf16.xpose.msra.mxu0 0
        %1011 = vmatprep.subr.bf16.mxu0 0
        %1012 = vmatpush1.bf16.xpose.msra.mxu0 0
        %1013 = vmatprep.mubr.bf16.mxu0 0
        %1014 = vmatmul.mubr.bf16.gmra.mrb[0].mxu0 %v976
        %v1015 = vpop.f32.mrb[0].mxu0
        %v1016 = vadd.f32 0.0, %v1015
        %v1017 = vpop.f32.mrb[0].mxu0
        %v1018 = vpop.f32.mrb[0].mxu0
        %v1019 = vpop.f32.mrb[0].mxu0
        %1020 = vdwg.mxu0
        %v1021 = vsel %vm863, %v1016, -inf
        %1022 = vmax.xlane.f32.xlu0 %v1021
        %v1023 = vpop.xlane.xlu0 %1022
        %v1024 = vsub.f32 %v1016, %v1023
        %v1025 = vmul.f32 %v1024, 1.442695
        %v1026 = vpow.pop %v1025
        %v1027 = vsel %vm863, %v1026, 0.0
        %1028 = vadd.xlane.f32.xlu0 %v1027
        %v1029 = vpop.xlane.xlu0 %1028
        %v1030 = vpack.c.bf16 %v1026, %v1026
        %1032 = vrot.lane.b32.xlu0 %v862, 120
        %v1033 = vpop.permute.xlu0 %1032
        %v1035 = vsel %vm863, %v1030, 0
        %v1038 = vsel %vm923, %v1033, 0
        %1040 = vmatprep.subr.bf16.mxu0 0
        %1041 = vmatpush1.bf16.msra.mxu0 %v1038
        %1042 = vmatprep.subr.bf16.mxu0 0
        %1043 = vmatpush1.bf16.msra.mxu0 0
        %1044 = vmatprep.subr.bf16.mxu0 0
        %1045 = vmatpush1.bf16.msra.mxu0 0
        %1046 = vmatprep.subr.bf16.mxu0 0
        %1047 = vmatpush1.bf16.msra.mxu0 0
        %1048 = vmatprep.subr.bf16.mxu0 0
        %1049 = vmatpush1.bf16.msra.mxu0 0
        %1050 = vmatprep.subr.bf16.mxu0 0
        %1051 = vmatpush1.bf16.msra.mxu0 0
        %1052 = vmatprep.subr.bf16.mxu0 0
        %1053 = vmatpush1.bf16.msra.mxu0 0
        %1054 = vmatprep.subr.bf16.mxu0 0
        %1055 = vmatpush1.bf16.msra.mxu0 0
        %1056 = vmatprep.subr.bf16.mxu0 0
        %1057 = vmatpush1.bf16.msra.mxu0 0
        %1058 = vmatprep.subr.bf16.mxu0 0
        %1059 = vmatpush1.bf16.msra.mxu0 0
        %1060 = vmatprep.subr.bf16.mxu0 0
        %1061 = vmatpush1.bf16.msra.mxu0 0
        %1062 = vmatprep.subr.bf16.mxu0 0
        %1063 = vmatpush1.bf16.msra.mxu0 0
        %1064 = vmatprep.subr.bf16.mxu0 0
        %1065 = vmatpush1.bf16.msra.mxu0 0
        %1066 = vmatprep.subr.bf16.mxu0 0
        %1067 = vmatpush1.bf16.msra.mxu0 0
        %1068 = vmatprep.subr.bf16.mxu0 0
        %1069 = vmatpush1.bf16.msra.mxu0 0
        %1070 = vmatprep.subr.bf16.mxu0 0
        %1071 = vmatpush1.bf16.msra.mxu0 0
        %1072 = vmatprep.mubr.bf16.mxu0 0
        %1073 = vmatmul.mubr.bf16.gmra.mrb[0].mxu0 %v1035
        %v1074 = vpop.f32.mrb[0].mxu0
        %v1075 = vadd.f32 0.0, %v1074
        %v1076 = vpop.f32.mrb[0].mxu0
        %v1077 = vpop.f32.mrb[0].mxu0
        %v1078 = vpop.f32.mrb[0].mxu0
        %1079 = vdwg.mxu0
        %v1080 = vrcp.pop %v1029
        %v1081 = vmul.f32 %v1075, %v1080
        %1082 = vrot.lane.b32.xlu0 %v860, 112
        %v1083 = vpop.permute.xlu0 %1082
        %1084 = vrot.lane.b32.xlu0 %v861, 112
        %v1085 = vpop.permute.xlu0 %1084
        %v1087 = vsel %vm863, %v1083, 0
        %v1090 = vsel %vm863, %v1085, 0
        %1092 = vmatprep.subr.bf16.mxu0 0
        %1093 = vmatpush1.bf16.xpose.msra.mxu0 %v1090
        %1094 = vmatprep.subr.bf16.mxu0 0
        %1095 = vmatpush1.bf16.xpose.msra.mxu0 0
        %1096 = vmatprep.subr.bf16.mxu0 0
        %1097 = vmatpush1.bf16.xpose.msra.mxu0 0
        %1098 = vmatprep.subr.bf16.mxu0 0
        %1099 = vmatpush1.bf16.xpose.msra.mxu0 0
        %1100 = vmatprep.subr.bf16.mxu0 0
        %1101 = vmatpush1.bf16.xpose.msra.mxu0 0
        %1102 = vmatprep.subr.bf16.mxu0 0
        %1103 = vmatpush1.bf16.xpose.msra.mxu0 0
        %1104 = vmatprep.subr.bf16.mxu0 0
        %1105 = vmatpush1.bf16.xpose.msra.mxu0 0
        %1106 = vmatprep.subr.bf16.mxu0 0
        %1107 = vmatpush1.bf16.xpose.msra.mxu0 0
        %1108 = vmatprep.subr.bf16.mxu0 0
        %1109 = vmatpush1.bf16.xpose.msra.mxu0 0
        %1110 = vmatprep.subr.bf16.mxu0 0
        %1111 = vmatpush1.bf16.xpose.msra.mxu0 0
        %1112 = vmatprep.subr.bf16.mxu0 0
        %1113 = vmatpush1.bf16.xpose.msra.mxu0 0
        %1114 = vmatprep.subr.bf16.mxu0 0
        %1115 = vmatpush1.bf16.xpose.msra.mxu0 0
        %1116 = vmatprep.subr.bf16.mxu0 0
        %1117 = vmatpush1.bf16.xpose.msra.mxu0 0
        %1118 = vmatprep.subr.bf16.mxu0 0
        %1119 = vmatpush1.bf16.xpose.msra.mxu0 0
        %1120 = vmatprep.subr.bf16.mxu0 0
        %1121 = vmatpush1.bf16.xpose.msra.mxu0 0
        %1122 = vmatprep.subr.bf16.mxu0 0
        %1123 = vmatpush1.bf16.xpose.msra.mxu0 0
        %1124 = vmatprep.mubr.bf16.mxu0 0
        %1125 = vmatmul.mubr.bf16.gmra.mrb[0].mxu0 %v1087
        %v1126 = vpop.f32.mrb[0].mxu0
        %v1127 = vadd.f32 0.0, %v1126
        %v1128 = vpop.f32.mrb[0].mxu0
        %v1129 = vpop.f32.mrb[0].mxu0
        %v1130 = vpop.f32.mrb[0].mxu0
        %1131 = vdwg.mxu0
        %v1132 = vsel %vm863, %v1127, -inf
        %1133 = vmax.xlane.f32.xlu0 %v1132
        %v1134 = vpop.xlane.xlu0 %1133
        %v1135 = vsub.f32 %v1127, %v1134
        %v1136 = vmul.f32 %v1135, 1.442695
        %v1137 = vpow.pop %v1136
        %v1138 = vsel %vm863, %v1137, 0.0
        %1139 = vadd.xlane.f32.xlu0 %v1138
        %v1140 = vpop.xlane.xlu0 %1139
        %v1141 = vpack.c.bf16 %v1137, %v1137
        %1142 = vrot.lane.b32.xlu0 %v862, 112
        %v1143 = vpop.permute.xlu0 %1142
        %v1145 = vsel %vm863, %v1141, 0
        %v1148 = vsel %vm923, %v1143, 0
        %1150 = vmatprep.subr.bf16.mxu0 0
        %1151 = vmatpush1.bf16.msra.mxu0 %v1148
        %1152 = vmatprep.subr.bf16.mxu0 0
        %1153 = vmatpush1.bf16.msra.mxu0 0
        %1154 = vmatprep.subr.bf16.mxu0 0
        %1155 = vmatpush1.bf16.msra.mxu0 0
        %1156 = vmatprep.subr.bf16.mxu0 0
        %1157 = vmatpush1.bf16.msra.mxu0 0
        %1158 = vmatprep.subr.bf16.mxu0 0
        %1159 = vmatpush1.bf16.msra.mxu0 0
        %1160 = vmatprep.subr.bf16.mxu0 0
        %1161 = vmatpush1.bf16.msra.mxu0 0
        %1162 = vmatprep.subr.bf16.mxu0 0
        %1163 = vmatpush1.bf16.msra.mxu0 0
        %1164 = vmatprep.subr.bf16.mxu0 0
        %1165 = vmatpush1.bf16.msra.mxu0 0
        %1166 = vmatprep.subr.bf16.mxu0 0
        %1167 = vmatpush1.bf16.msra.mxu0 0
        %1168 = vmatprep.subr.bf16.mxu0 0
        %1169 = vmatpush1.bf16.msra.mxu0 0
        %1170 = vmatprep.subr.bf16.mxu0 0
        %1171 = vmatpush1.bf16.msra.mxu0 0
        %1172 = vmatprep.subr.bf16.mxu0 0
        %1173 = vmatpush1.bf16.msra.mxu0 0
        %1174 = vmatprep.subr.bf16.mxu0 0
        %1175 = vmatpush1.bf16.msra.mxu0 0
        %1176 = vmatprep.subr.bf16.mxu0 0
        %1177 = vmatpush1.bf16.msra.mxu0 0
        %1178 = vmatprep.subr.bf16.mxu0 0
        %1179 = vmatpush1.bf16.msra.mxu0 0
        %1180 = vmatprep.subr.bf16.mxu0 0
        %1181 = vmatpush1.bf16.msra.mxu0 0
        %1182 = vmatprep.mubr.bf16.mxu0 0
        %1183 = vmatmul.mubr.bf16.gmra.mrb[0].mxu0 %v1145
        %v1184 = vpop.f32.mrb[0].mxu0
        %v1185 = vadd.f32 0.0, %v1184
        %v1186 = vpop.f32.mrb[0].mxu0
        %v1187 = vpop.f32.mrb[0].mxu0
        %v1188 = vpop.f32.mrb[0].mxu0
        %1189 = vdwg.mxu0
        %v1190 = vrcp.pop %v1140
        %v1191 = vmul.f32 %v1185, %v1190
        %1192 = vrot.lane.b32.xlu0 %v860, 104
        %v1193 = vpop.permute.xlu0 %1192
        %1194 = vrot.lane.b32.xlu0 %v861, 104
        %v1195 = vpop.permute.xlu0 %1194
        %v1197 = vsel %vm863, %v1193, 0
        %v1200 = vsel %vm863, %v1195, 0
        %1202 = vmatprep.subr.bf16.mxu0 0
        %1203 = vmatpush1.bf16.xpose.msra.mxu0 %v1200
        %1204 = vmatprep.subr.bf16.mxu0 0
        %1205 = vmatpush1.bf16.xpose.msra.mxu0 0
        %1206 = vmatprep.subr.bf16.mxu0 0
        %1207 = vmatpush1.bf16.xpose.msra.mxu0 0
        %1208 = vmatprep.subr.bf16.mxu0 0
        %1209 = vmatpush1.bf16.xpose.msra.mxu0 0
        %1210 = vmatprep.subr.bf16.mxu0 0
        %1211 = vmatpush1.bf16.xpose.msra.mxu0 0
        %1212 = vmatprep.subr.bf16.mxu0 0
        %1213 = vmatpush1.bf16.xpose.msra.mxu0 0
        %1214 = vmatprep.subr.bf16.mxu0 0
        %1215 = vmatpush1.bf16.xpose.msra.mxu0 0
        %1216 = vmatprep.subr.bf16.mxu0 0
        %1217 = vmatpush1.bf16.xpose.msra.mxu0 0
        %1218 = vmatprep.subr.bf16.mxu0 0
        %1219 = vmatpush1.bf16.xpose.msra.mxu0 0
        %1220 = vmatprep.subr.bf16.mxu0 0
        %1221 = vmatpush1.bf16.xpose.msra.mxu0 0
        %1222 = vmatprep.subr.bf16.mxu0 0
        %1223 = vmatpush1.bf16.xpose.msra.mxu0 0
        %1224 = vmatprep.subr.bf16.mxu0 0
        %1225 = vmatpush1.bf16.xpose.msra.mxu0 0
        %1226 = vmatprep.subr.bf16.mxu0 0
        %1227 = vmatpush1.bf16.xpose.msra.mxu0 0
        %1228 = vmatprep.subr.bf16.mxu0 0
        %1229 = vmatpush1.bf16.xpose.msra.mxu0 0
        %1230 = vmatprep.subr.bf16.mxu0 0
        %1231 = vmatpush1.bf16.xpose.msra.mxu0 0
        %1232 = vmatprep.subr.bf16.mxu0 0
        %1233 = vmatpush1.bf16.xpose.msra.mxu0 0
        %1234 = vmatprep.mubr.bf16.mxu0 0
        %1235 = vmatmul.mubr.bf16.gmra.mrb[0].mxu0 %v1197
        %v1236 = vpop.f32.mrb[0].mxu0
        %v1237 = vadd.f32 0.0, %v1236
        %v1238 = vpop.f32.mrb[0].mxu0
        %v1239 = vpop.f32.mrb[0].mxu0
        %v1240 = vpop.f32.mrb[0].mxu0
        %1241 = vdwg.mxu0
        %v1242 = vsel %vm863, %v1237, -inf
        %1243 = vmax.xlane.f32.xlu0 %v1242
        %v1244 = vpop.xlane.xlu0 %1243
        %v1245 = vsub.f32 %v1237, %v1244
        %v1246 = vmul.f32 %v1245, 1.442695
        %v1247 = vpow.pop %v1246
        %v1248 = vsel %vm863, %v1247, 0.0
        %1249 = vadd.xlane.f32.xlu0 %v1248
        %v1250 = vpop.xlane.xlu0 %1249
        %v1251 = vpack.c.bf16 %v1247, %v1247
        %1252 = vrot.lane.b32.xlu0 %v862, 104
        %v1253 = vpop.permute.xlu0 %1252
        %v1255 = vsel %vm863, %v1251, 0
        %v1258 = vsel %vm923, %v1253, 0
        %1260 = vmatprep.subr.bf16.mxu0 0
        %1261 = vmatpush1.bf16.msra.mxu0 %v1258
        %1262 = vmatprep.subr.bf16.mxu0 0
        %1263 = vmatpush1.bf16.msra.mxu0 0
        %1264 = vmatprep.subr.bf16.mxu0 0
        %1265 = vmatpush1.bf16.msra.mxu0 0
        %1266 = vmatprep.subr.bf16.mxu0 0
        %1267 = vmatpush1.bf16.msra.mxu0 0
        %1268 = vmatprep.subr.bf16.mxu0 0
        %1269 = vmatpush1.bf16.msra.mxu0 0
        %1270 = vmatprep.subr.bf16.mxu0 0
        %1271 = vmatpush1.bf16.msra.mxu0 0
        %1272 = vmatprep.subr.bf16.mxu0 0
        %1273 = vmatpush1.bf16.msra.mxu0 0
        %1274 = vmatprep.subr.bf16.mxu0 0
        %1275 = vmatpush1.bf16.msra.mxu0 0
        %1276 = vmatprep.subr.bf16.mxu0 0
        %1277 = vmatpush1.bf16.msra.mxu0 0
        %1278 = vmatprep.subr.bf16.mxu0 0
        %1279 = vmatpush1.bf16.msra.mxu0 0
        %1280 = vmatprep.subr.bf16.mxu0 0
        %1281 = vmatpush1.bf16.msra.mxu0 0
        %1282 = vmatprep.subr.bf16.mxu0 0
        %1283 = vmatpush1.bf16.msra.mxu0 0
        %1284 = vmatprep.subr.bf16.mxu0 0
        %1285 = vmatpush1.bf16.msra.mxu0 0
        %1286 = vmatprep.subr.bf16.mxu0 0
        %1287 = vmatpush1.bf16.msra.mxu0 0
        %1288 = vmatprep.subr.bf16.mxu0 0
        %1289 = vmatpush1.bf16.msra.mxu0 0
        %1290 = vmatprep.subr.bf16.mxu0 0
        %1291 = vmatpush1.bf16.msra.mxu0 0
        %1292 = vmatprep.mubr.bf16.mxu0 0
        %1293 = vmatmul.mubr.bf16.gmra.mrb[0].mxu0 %v1255
        %v1294 = vpop.f32.mrb[0].mxu0
        %v1295 = vadd.f32 0.0, %v1294
        %v1296 = vpop.f32.mrb[0].mxu0
        %v1297 = vpop.f32.mrb[0].mxu0
        %v1298 = vpop.f32.mrb[0].mxu0
        %1299 = vdwg.mxu0
        %v1300 = vrcp.pop %v1250
        %v1301 = vmul.f32 %v1295, %v1300
        %1303 = vrot.lane.b32.xlu0 %v1081, 8
        %v1304 = vpop.permute.xlu0 %1303
        %1307 = vrot.lane.b32.xlu0 %v1191, 16
        %v1308 = vpop.permute.xlu0 %1307
        %1311 = vrot.lane.b32.xlu0 %v1301, 24
        %v1312 = vpop.permute.xlu0 %1311
        %v1314 = vsel %vm863, %v968, %v1304
        %vm1315 = vcmask 130048
        %v1316 = vsel %vm1315, %v1314, %v1308
        %vm1317 = vcmask 195584
        %v1318 = vsel %vm1317, %v1316, %v1312
        %v1319 = vrot.slane %v860, 4
        %v1320 = vrot.slane %v861, 4
        %v1322 = vsel %vm863, %v1319, 0
        %v1325 = vsel %vm863, %v1320, 0
        %1327 = vmatprep.subr.bf16.mxu0 0
        %1328 = vmatpush1.bf16.xpose.msra.mxu0 %v1325
        %1329 = vmatprep.subr.bf16.mxu0 0
        %1330 = vmatpush1.bf16.xpose.msra.mxu0 0
        %1331 = vmatprep.subr.bf16.mxu0 0
        %1332 = vmatpush1.bf16.xpose.msra.mxu0 0
        %1333 = vmatprep.subr.bf16.mxu0 0
        %1334 = vmatpush1.bf16.xpose.msra.mxu0 0
        %1335 = vmatprep.subr.bf16.mxu0 0
        %1336 = vmatpush1.bf16.xpose.msra.mxu0 0
        %1337 = vmatprep.subr.bf16.mxu0 0
        %1338 = vmatpush1.bf16.xpose.msra.mxu0 0
        %1339 = vmatprep.subr.bf16.mxu0 0
        %1340 = vmatpush1.bf16.xpose.msra.mxu0 0
        %1341 = vmatprep.subr.bf16.mxu0 0
        %1342 = vmatpush1.bf16.xpose.msra.mxu0 0
        %1343 = vmatprep.subr.bf16.mxu0 0
        %1344 = vmatpush1.bf16.xpose.msra.mxu0 0
        %1345 = vmatprep.subr.bf16.mxu0 0
        %1346 = vmatpush1.bf16.xpose.msra.mxu0 0
        %1347 = vmatprep.subr.bf16.mxu0 0
        %1348 = vmatpush1.bf16.xpose.msra.mxu0 0
        %1349 = vmatprep.subr.bf16.mxu0 0
        %1350 = vmatpush1.bf16.xpose.msra.mxu0 0
        %1351 = vmatprep.subr.bf16.mxu0 0
        %1352 = vmatpush1.bf16.xpose.msra.mxu0 0
        %1353 = vmatprep.subr.bf16.mxu0 0
        %1354 = vmatpush1.bf16.xpose.msra.mxu0 0
        %1355 = vmatprep.subr.bf16.mxu0 0
        %1356 = vmatpush1.bf16.xpose.msra.mxu0 0
        %1357 = vmatprep.subr.bf16.mxu0 0
        %1358 = vmatpush1.bf16.xpose.msra.mxu0 0
        %1359 = vmatprep.mubr.bf16.mxu0 0
        %1360 = vmatmul.mubr.bf16.gmra.mrb[0].mxu0 %v1322
        %v1361 = vpop.f32.mrb[0].mxu0
        %v1362 = vadd.f32 0.0, %v1361
        %v1363 = vpop.f32.mrb[0].mxu0
        %v1364 = vpop.f32.mrb[0].mxu0
        %v1365 = vpop.f32.mrb[0].mxu0
        %1366 = vdwg.mxu0
        %v1367 = vsel %vm863, %v1362, -inf
        %1368 = vmax.xlane.f32.xlu0 %v1367
        %v1369 = vpop.xlane.xlu0 %1368
        %v1370 = vsub.f32 %v1362, %v1369
        %v1371 = vmul.f32 %v1370, 1.442695
        %v1372 = vpow.pop %v1371
        %v1373 = vsel %vm863, %v1372, 0.0
        %1374 = vadd.xlane.f32.xlu0 %v1373
        %v1375 = vpop.xlane.xlu0 %1374
        %v1376 = vpack.c.bf16 %v1372, %v1372
        %v1377 = vrot.slane %v862, 4
        %v1379 = vsel %vm863, %v1376, 0
        %v1382 = vsel %vm923, %v1377, 0
        %1384 = vmatprep.subr.bf16.mxu0 0
        %1385 = vmatpush1.bf16.msra.mxu0 %v1382
        %1386 = vmatprep.subr.bf16.mxu0 0
        %1387 = vmatpush1.bf16.msra.mxu0 0
        %1388 = vmatprep.subr.bf16.mxu0 0
        %1389 = vmatpush1.bf16.msra.mxu0 0
        %1390 = vmatprep.subr.bf16.mxu0 0
        %1391 = vmatpush1.bf16.msra.mxu0 0
        %1392 = vmatprep.subr.bf16.mxu0 0
        %1393 = vmatpush1.bf16.msra.mxu0 0
        %1394 = vmatprep.subr.bf16.mxu0 0
        %1395 = vmatpush1.bf16.msra.mxu0 0
        %1396 = vmatprep.subr.bf16.mxu0 0
        %1397 = vmatpush1.bf16.msra.mxu0 0
        %1398 = vmatprep.subr.bf16.mxu0 0
        %1399 = vmatpush1.bf16.msra.mxu0 0
        %1400 = vmatprep.subr.bf16.mxu0 0
        %1401 = vmatpush1.bf16.msra.mxu0 0
        %1402 = vmatprep.subr.bf16.mxu0 0
        %1403 = vmatpush1.bf16.msra.mxu0 0
        %1404 = vmatprep.subr.bf16.mxu0 0
        %1405 = vmatpush1.bf16.msra.mxu0 0
        %1406 = vmatprep.subr.bf16.mxu0 0
        %1407 = vmatpush1.bf16.msra.mxu0 0
        %1408 = vmatprep.subr.bf16.mxu0 0
        %1409 = vmatpush1.bf16.msra.mxu0 0
        %1410 = vmatprep.subr.bf16.mxu0 0
        %1411 = vmatpush1.bf16.msra.mxu0 0
        %1412 = vmatprep.subr.bf16.mxu0 0
        %1413 = vmatpush1.bf16.msra.mxu0 0
        %1414 = vmatprep.subr.bf16.mxu0 0
        %1415 = vmatpush1.bf16.msra.mxu0 0
        %1416 = vmatprep.mubr.bf16.mxu0 0
        %1417 = vmatmul.mubr.bf16.gmra.mrb[0].mxu0 %v1379
        %v1418 = vpop.f32.mrb[0].mxu0
        %v1419 = vadd.f32 0.0, %v1418
        %v1420 = vpop.f32.mrb[0].mxu0
        %v1421 = vpop.f32.mrb[0].mxu0
        %v1422 = vpop.f32.mrb[0].mxu0
        %1423 = vdwg.mxu0
        %v1424 = vrcp.pop %v1375
        %v1425 = vmul.f32 %v1419, %v1424
        %1426 = vrot.lane.b32.xlu0 %v1319, 120
        %v1427 = vpop.permute.xlu0 %1426
        %1428 = vrot.lane.b32.xlu0 %v1320, 120
        %v1429 = vpop.permute.xlu0 %1428
        %v1431 = vsel %vm863, %v1427, 0
        %v1434 = vsel %vm863, %v1429, 0
        %1436 = vmatprep.subr.bf16.mxu0 0
        %1437 = vmatpush1.bf16.xpose.msra.mxu0 %v1434
        %1438 = vmatprep.subr.bf16.mxu0 0
        %1439 = vmatpush1.bf16.xpose.msra.mxu0 0
        %1440 = vmatprep.subr.bf16.mxu0 0
        %1441 = vmatpush1.bf16.xpose.msra.mxu0 0
        %1442 = vmatprep.subr.bf16.mxu0 0
        %1443 = vmatpush1.bf16.xpose.msra.mxu0 0
        %1444 = vmatprep.subr.bf16.mxu0 0
        %1445 = vmatpush1.bf16.xpose.msra.mxu0 0
        %1446 = vmatprep.subr.bf16.mxu0 0
        %1447 = vmatpush1.bf16.xpose.msra.mxu0 0
        %1448 = vmatprep.subr.bf16.mxu0 0
        %1449 = vmatpush1.bf16.xpose.msra.mxu0 0
        %1450 = vmatprep.subr.bf16.mxu0 0
        %1451 = vmatpush1.bf16.xpose.msra.mxu0 0
        %1452 = vmatprep.subr.bf16.mxu0 0
        %1453 = vmatpush1.bf16.xpose.msra.mxu0 0
        %1454 = vmatprep.subr.bf16.mxu0 0
        %1455 = vmatpush1.bf16.xpose.msra.mxu0 0
        %1456 = vmatprep.subr.bf16.mxu0 0
        %1457 = vmatpush1.bf16.xpose.msra.mxu0 0
        %1458 = vmatprep.subr.bf16.mxu0 0
        %1459 = vmatpush1.bf16.xpose.msra.mxu0 0
        %1460 = vmatprep.subr.bf16.mxu0 0
        %1461 = vmatpush1.bf16.xpose.msra.mxu0 0
        %1462 = vmatprep.subr.bf16.mxu0 0
        %1463 = vmatpush1.bf16.xpose.msra.mxu0 0
        %1464 = vmatprep.subr.bf16.mxu0 0
        %1465 = vmatpush1.bf16.xpose.msra.mxu0 0
        %1466 = vmatprep.subr.bf16.mxu0 0
        %1467 = vmatpush1.bf16.xpose.msra.mxu0 0
        %1468 = vmatprep.mubr.bf16.mxu0 0
        %1469 = vmatmul.mubr.bf16.gmra.mrb[0].mxu0 %v1431
        %v1470 = vpop.f32.mrb[0].mxu0
        %v1471 = vadd.f32 0.0, %v1470
        %v1472 = vpop.f32.mrb[0].mxu0
        %v1473 = vpop.f32.mrb[0].mxu0
        %v1474 = vpop.f32.mrb[0].mxu0
        %1475 = vdwg.mxu0
        %v1476 = vsel %vm863, %v1471, -inf
        %1477 = vmax.xlane.f32.xlu0 %v1476
        %v1478 = vpop.xlane.xlu0 %1477
        %v1479 = vsub.f32 %v1471, %v1478
        %v1480 = vmul.f32 %v1479, 1.442695
        %v1481 = vpow.pop %v1480
        %v1482 = vsel %vm863, %v1481, 0.0
        %1483 = vadd.xlane.f32.xlu0 %v1482
        %v1484 = vpop.xlane.xlu0 %1483
        %v1485 = vpack.c.bf16 %v1481, %v1481
        %1486 = vrot.lane.b32.xlu0 %v1377, 120
        %v1487 = vpop.permute.xlu0 %1486
        %v1489 = vsel %vm863, %v1485, 0
        %v1492 = vsel %vm923, %v1487, 0
        %1494 = vmatprep.subr.bf16.mxu0 0
        %1495 = vmatpush1.bf16.msra.mxu0 %v1492
        %1496 = vmatprep.subr.bf16.mxu0 0
        %1497 = vmatpush1.bf16.msra.mxu0 0
        %1498 = vmatprep.subr.bf16.mxu0 0
        %1499 = vmatpush1.bf16.msra.mxu0 0
        %1500 = vmatprep.subr.bf16.mxu0 0
        %1501 = vmatpush1.bf16.msra.mxu0 0
        %1502 = vmatprep.subr.bf16.mxu0 0
        %1503 = vmatpush1.bf16.msra.mxu0 0
        %1504 = vmatprep.subr.bf16.mxu0 0
        %1505 = vmatpush1.bf16.msra.mxu0 0
        %1506 = vmatprep.subr.bf16.mxu0 0
        %1507 = vmatpush1.bf16.msra.mxu0 0
        %1508 = vmatprep.subr.bf16.mxu0 0
        %1509 = vmatpush1.bf16.msra.mxu0 0
        %1510 = vmatprep.subr.bf16.mxu0 0
        %1511 = vmatpush1.bf16.msra.mxu0 0
        %1512 = vmatprep.subr.bf16.mxu0 0
        %1513 = vmatpush1.bf16.msra.mxu0 0
        %1514 = vmatprep.subr.bf16.mxu0 0
        %1515 = vmatpush1.bf16.msra.mxu0 0
        %1516 = vmatprep.subr.bf16.mxu0 0
        %1517 = vmatpush1.bf16.msra.mxu0 0
        %1518 = vmatprep.subr.bf16.mxu0 0
        %1519 = vmatpush1.bf16.msra.mxu0 0
        %1520 = vmatprep.subr.bf16.mxu0 0
        %1521 = vmatpush1.bf16.msra.mxu0 0
        %1522 = vmatprep.subr.bf16.mxu0 0
        %1523 = vmatpush1.bf16.msra.mxu0 0
        %1524 = vmatprep.subr.bf16.mxu0 0
        %1525 = vmatpush1.bf16.msra.mxu0 0
        %1526 = vmatprep.mubr.bf16.mxu0 0
        %1527 = vmatmul.mubr.bf16.gmra.mrb[0].mxu0 %v1489
        %v1528 = vpop.f32.mrb[0].mxu0
        %v1529 = vadd.f32 0.0, %v1528
        %v1530 = vpop.f32.mrb[0].mxu0
        %v1531 = vpop.f32.mrb[0].mxu0
        %v1532 = vpop.f32.mrb[0].mxu0
        %1533 = vdwg.mxu0
        %v1534 = vrcp.pop %v1484
        %v1535 = vmul.f32 %v1529, %v1534
        %1536 = vrot.lane.b32.xlu0 %v1319, 112
        %v1537 = vpop.permute.xlu0 %1536
        %1538 = vrot.lane.b32.xlu0 %v1320, 112
        %v1539 = vpop.permute.xlu0 %1538
        %v1541 = vsel %vm863, %v1537, 0
        %v1544 = vsel %vm863, %v1539, 0
        %1546 = vmatprep.subr.bf16.mxu0 0
        %1547 = vmatpush1.bf16.xpose.msra.mxu0 %v1544
        %1548 = vmatprep.subr.bf16.mxu0 0
        %1549 = vmatpush1.bf16.xpose.msra.mxu0 0
        %1550 = vmatprep.subr.bf16.mxu0 0
        %1551 = vmatpush1.bf16.xpose.msra.mxu0 0
        %1552 = vmatprep.subr.bf16.mxu0 0
        %1553 = vmatpush1.bf16.xpose.msra.mxu0 0
        %1554 = vmatprep.subr.bf16.mxu0 0
        %1555 = vmatpush1.bf16.xpose.msra.mxu0 0
        %1556 = vmatprep.subr.bf16.mxu0 0
        %1557 = vmatpush1.bf16.xpose.msra.mxu0 0
        %1558 = vmatprep.subr.bf16.mxu0 0
        %1559 = vmatpush1.bf16.xpose.msra.mxu0 0
        %1560 = vmatprep.subr.bf16.mxu0 0
        %1561 = vmatpush1.bf16.xpose.msra.mxu0 0
        %1562 = vmatprep.subr.bf16.mxu0 0
        %1563 = vmatpush1.bf16.xpose.msra.mxu0 0
        %1564 = vmatprep.subr.bf16.mxu0 0
        %1565 = vmatpush1.bf16.xpose.msra.mxu0 0
        %1566 = vmatprep.subr.bf16.mxu0 0
        %1567 = vmatpush1.bf16.xpose.msra.mxu0 0
        %1568 = vmatprep.subr.bf16.mxu0 0
        %1569 = vmatpush1.bf16.xpose.msra.mxu0 0
        %1570 = vmatprep.subr.bf16.mxu0 0
        %1571 = vmatpush1.bf16.xpose.msra.mxu0 0
        %1572 = vmatprep.subr.bf16.mxu0 0
        %1573 = vmatpush1.bf16.xpose.msra.mxu0 0
        %1574 = vmatprep.subr.bf16.mxu0 0
        %1575 = vmatpush1.bf16.xpose.msra.mxu0 0
        %1576 = vmatprep.subr.bf16.mxu0 0
        %1577 = vmatpush1.bf16.xpose.msra.mxu0 0
        %1578 = vmatprep.mubr.bf16.mxu0 0
        %1579 = vmatmul.mubr.bf16.gmra.mrb[0].mxu0 %v1541
        %v1580 = vpop.f32.mrb[0].mxu0
        %v1581 = vadd.f32 0.0, %v1580
        %v1582 = vpop.f32.mrb[0].mxu0
        %v1583 = vpop.f32.mrb[0].mxu0
        %v1584 = vpop.f32.mrb[0].mxu0
        %1585 = vdwg.mxu0
        %v1586 = vsel %vm863, %v1581, -inf
        %1587 = vmax.xlane.f32.xlu0 %v1586
        %v1588 = vpop.xlane.xlu0 %1587
        %v1589 = vsub.f32 %v1581, %v1588
        %v1590 = vmul.f32 %v1589, 1.442695
        %v1591 = vpow.pop %v1590
        %v1592 = vsel %vm863, %v1591, 0.0
        %1593 = vadd.xlane.f32.xlu0 %v1592
        %v1594 = vpop.xlane.xlu0 %1593
        %v1595 = vpack.c.bf16 %v1591, %v1591
        %1596 = vrot.lane.b32.xlu0 %v1377, 112
        %v1597 = vpop.permute.xlu0 %1596
        %v1599 = vsel %vm863, %v1595, 0
        %v1602 = vsel %vm923, %v1597, 0
        %1604 = vmatprep.subr.bf16.mxu0 0
        %1605 = vmatpush1.bf16.msra.mxu0 %v1602
        %1606 = vmatprep.subr.bf16.mxu0 0
        %1607 = vmatpush1.bf16.msra.mxu0 0
        %1608 = vmatprep.subr.bf16.mxu0 0
        %1609 = vmatpush1.bf16.msra.mxu0 0
        %1610 = vmatprep.subr.bf16.mxu0 0
        %1611 = vmatpush1.bf16.msra.mxu0 0
        %1612 = vmatprep.subr.bf16.mxu0 0
        %1613 = vmatpush1.bf16.msra.mxu0 0
        %1614 = vmatprep.subr.bf16.mxu0 0
        %1615 = vmatpush1.bf16.msra.mxu0 0
        %1616 = vmatprep.subr.bf16.mxu0 0
        %1617 = vmatpush1.bf16.msra.mxu0 0
        %1618 = vmatprep.subr.bf16.mxu0 0
        %1619 = vmatpush1.bf16.msra.mxu0 0
        %1620 = vmatprep.subr.bf16.mxu0 0
        %1621 = vmatpush1.bf16.msra.mxu0 0
        %1622 = vmatprep.subr.bf16.mxu0 0
        %1623 = vmatpush1.bf16.msra.mxu0 0
        %1624 = vmatprep.subr.bf16.mxu0 0
        %1625 = vmatpush1.bf16.msra.mxu0 0
        %1626 = vmatprep.subr.bf16.mxu0 0
        %1627 = vmatpush1.bf16.msra.mxu0 0
        %1628 = vmatprep.subr.bf16.mxu0 0
        %1629 = vmatpush1.bf16.msra.mxu0 0
        %1630 = vmatprep.subr.bf16.mxu0 0
        %1631 = vmatpush1.bf16.msra.mxu0 0
        %1632 = vmatprep.subr.bf16.mxu0 0
        %1633 = vmatpush1.bf16.msra.mxu0 0
        %1634 = vmatprep.subr.bf16.mxu0 0
        %1635 = vmatpush1.bf16.msra.mxu0 0
        %1636 = vmatprep.mubr.bf16.mxu0 0
        %1637 = vmatmul.mubr.bf16.gmra.mrb[0].mxu0 %v1599
        %v1638 = vpop.f32.mrb[0].mxu0
        %v1639 = vadd.f32 0.0, %v1638
        %v1640 = vpop.f32.mrb[0].mxu0
        %v1641 = vpop.f32.mrb[0].mxu0
        %v1642 = vpop.f32.mrb[0].mxu0
        %1643 = vdwg.mxu0
        %v1644 = vrcp.pop %v1594
        %v1645 = vmul.f32 %v1639, %v1644
        %1646 = vrot.lane.b32.xlu0 %v1319, 104
        %v1647 = vpop.permute.xlu0 %1646
        %1648 = vrot.lane.b32.xlu0 %v1320, 104
        %v1649 = vpop.permute.xlu0 %1648
        %v1651 = vsel %vm863, %v1647, 0
        %v1654 = vsel %vm863, %v1649, 0
        %1656 = vmatprep.subr.bf16.mxu0 0
        %1657 = vmatpush1.bf16.xpose.msra.mxu0 %v1654
        %1658 = vmatprep.subr.bf16.mxu0 0
        %1659 = vmatpush1.bf16.xpose.msra.mxu0 0
        %1660 = vmatprep.subr.bf16.mxu0 0
        %1661 = vmatpush1.bf16.xpose.msra.mxu0 0
        %1662 = vmatprep.subr.bf16.mxu0 0
        %1663 = vmatpush1.bf16.xpose.msra.mxu0 0
        %1664 = vmatprep.subr.bf16.mxu0 0
        %1665 = vmatpush1.bf16.xpose.msra.mxu0 0
        %1666 = vmatprep.subr.bf16.mxu0 0
        %1667 = vmatpush1.bf16.xpose.msra.mxu0 0
        %1668 = vmatprep.subr.bf16.mxu0 0
        %1669 = vmatpush1.bf16.xpose.msra.mxu0 0
        %1670 = vmatprep.subr.bf16.mxu0 0
        %1671 = vmatpush1.bf16.xpose.msra.mxu0 0
        %1672 = vmatprep.subr.bf16.mxu0 0
        %1673 = vmatpush1.bf16.xpose.msra.mxu0 0
        %1674 = vmatprep.subr.bf16.mxu0 0
        %1675 = vmatpush1.bf16.xpose.msra.mxu0 0
        %1676 = vmatprep.subr.bf16.mxu0 0
        %1677 = vmatpush1.bf16.xpose.msra.mxu0 0
        %1678 = vmatprep.subr.bf16.mxu0 0
        %1679 = vmatpush1.bf16.xpose.msra.mxu0 0
        %1680 = vmatprep.subr.bf16.mxu0 0
        %1681 = vmatpush1.bf16.xpose.msra.mxu0 0
        %1682 = vmatprep.subr.bf16.mxu0 0
        %1683 = vmatpush1.bf16.xpose.msra.mxu0 0
        %1684 = vmatprep.subr.bf16.mxu0 0
        %1685 = vmatpush1.bf16.xpose.msra.mxu0 0
        %1686 = vmatprep.subr.bf16.mxu0 0
        %1687 = vmatpush1.bf16.xpose.msra.mxu0 0
        %1688 = vmatprep.mubr.bf16.mxu0 0
        %1689 = vmatmul.mubr.bf16.gmra.mrb[0].mxu0 %v1651
        %v1690 = vpop.f32.mrb[0].mxu0
        %v1691 = vadd.f32 0.0, %v1690
        %v1692 = vpop.f32.mrb[0].mxu0
        %v1693 = vpop.f32.mrb[0].mxu0
        %v1694 = vpop.f32.mrb[0].mxu0
        %1695 = vdwg.mxu0
        %v1696 = vsel %vm863, %v1691, -inf
        %1697 = vmax.xlane.f32.xlu0 %v1696
        %v1698 = vpop.xlane.xlu0 %1697
        %v1699 = vsub.f32 %v1691, %v1698
        %v1700 = vmul.f32 %v1699, 1.442695
        %v1701 = vpow.pop %v1700
        %v1702 = vsel %vm863, %v1701, 0.0
        %1703 = vadd.xlane.f32.xlu0 %v1702
        %v1704 = vpop.xlane.xlu0 %1703
        %v1705 = vpack.c.bf16 %v1701, %v1701
        %1706 = vrot.lane.b32.xlu0 %v1377, 104
        %v1707 = vpop.permute.xlu0 %1706
        %v1709 = vsel %vm863, %v1705, 0
        %v1712 = vsel %vm923, %v1707, 0
        %1714 = vmatprep.subr.bf16.mxu0 0
        %1715 = vmatpush1.bf16.msra.mxu0 %v1712
        %1716 = vmatprep.subr.bf16.mxu0 0
        %1717 = vmatpush1.bf16.msra.mxu0 0
        %1718 = vmatprep.subr.bf16.mxu0 0
        %1719 = vmatpush1.bf16.msra.mxu0 0
        %1720 = vmatprep.subr.bf16.mxu0 0
        %1721 = vmatpush1.bf16.msra.mxu0 0
        %1722 = vmatprep.subr.bf16.mxu0 0
        %1723 = vmatpush1.bf16.msra.mxu0 0
        %1724 = vmatprep.subr.bf16.mxu0 0
        %1725 = vmatpush1.bf16.msra.mxu0 0
        %1726 = vmatprep.subr.bf16.mxu0 0
        %1727 = vmatpush1.bf16.msra.mxu0 0
        %1728 = vmatprep.subr.bf16.mxu0 0
        %1729 = vmatpush1.bf16.msra.mxu0 0
        %1730 = vmatprep.subr.bf16.mxu0 0
        %1731 = vmatpush1.bf16.msra.mxu0 0
        %1732 = vmatprep.subr.bf16.mxu0 0
        %1733 = vmatpush1.bf16.msra.mxu0 0
        %1734 = vmatprep.subr.bf16.mxu0 0
        %1735 = vmatpush1.bf16.msra.mxu0 0
        %1736 = vmatprep.subr.bf16.mxu0 0
        %1737 = vmatpush1.bf16.msra.mxu0 0
        %1738 = vmatprep.subr.bf16.mxu0 0
        %1739 = vmatpush1.bf16.msra.mxu0 0
        %1740 = vmatprep.subr.bf16.mxu0 0
        %1741 = vmatpush1.bf16.msra.mxu0 0
        %1742 = vmatprep.subr.bf16.mxu0 0
        %1743 = vmatpush1.bf16.msra.mxu0 0
        %1744 = vmatprep.subr.bf16.mxu0 0
        %1745 = vmatpush1.bf16.msra.mxu0 0
        %1746 = vmatprep.mubr.bf16.mxu0 0
        %1747 = vmatmul.mubr.bf16.gmra.mrb[0].mxu0 %v1709
        %v1748 = vpop.f32.mrb[0].mxu0
        %v1749 = vadd.f32 0.0, %v1748
        %v1750 = vpop.f32.mrb[0].mxu0
        %v1751 = vpop.f32.mrb[0].mxu0
        %v1752 = vpop.f32.mrb[0].mxu0
        %1753 = vdwg.mxu0
        %v1754 = vrcp.pop %v1704
        %v1755 = vmul.f32 %v1749, %v1754
        %1757 = vrot.lane.b32.xlu0 %v1535, 8
        %v1758 = vpop.permute.xlu0 %1757
        %1761 = vrot.lane.b32.xlu0 %v1645, 16
        %v1762 = vpop.permute.xlu0 %1761
        %1765 = vrot.lane.b32.xlu0 %v1755, 24
        %v1766 = vpop.permute.xlu0 %1765
        %v1768 = vsel %vm863, %v1425, %v1758
        %v1769 = vsel %vm1315, %v1768, %v1762
        %v1770 = vsel %vm1317, %v1769, %v1766
        %v1771 = vpack.c.bf16 %v1770, %v1318
        %v1772 = vld [vmem:[%s534] sm:$0xf]
        %v1773 = vld [vmem:[%s534 + $0x4] sm:$0xf]
        %v1774 = vld [vmem:[%s534 + $0x8] sm:$0xf]
        %v1775 = vld [vmem:[%s534 + $0xc] sm:$0xf]
        %v1776 = vlaneseq
        %v1777 = vshrl.u32 %v1776, 7
        %v1778 = vsub.s32 5, %v1777
        %v1779 = vrot.slane %v628, %v1778
        %v1784 = vunpack.c.l.b16 %v1772
        %v1785 = vunpack.c.l.b16 %v1773
        %v1786 = vunpack.c.l.b16 %v1774
        %v1787 = vunpack.c.l.b16 %v1775
        %v1788 = vpack.c.b16 %v1785, %v1784
        %v1789 = vpack.c.b16 %v1787, %v1786
        %v1793 = vsel %vm631, %v1771, 0
        %1795 = vmatprep.subr.bf16.mxu0 0
        %1796 = vmatpush1.bf16.msra.mxu0 %v1788
        %1797 = vmatprep.subr.bf16.mxu0 0
        %1798 = vmatpush1.bf16.msra.mxu0 %v1789
        %1799 = vmatprep.subr.bf16.mxu0 0
        %1800 = vmatpush1.bf16.msra.mxu0 0
        %1801 = vmatprep.subr.bf16.mxu0 0
        %1802 = vmatpush1.bf16.msra.mxu0 0
        %1803 = vmatprep.subr.bf16.mxu0 0
        %1804 = vmatpush1.bf16.msra.mxu0 0
        %1805 = vmatprep.subr.bf16.mxu0 0
        %1806 = vmatpush1.bf16.msra.mxu0 0
        %1807 = vmatprep.subr.bf16.mxu0 0
        %1808 = vmatpush1.bf16.msra.mxu0 0
        %1809 = vmatprep.subr.bf16.mxu0 0
        %1810 = vmatpush1.bf16.msra.mxu0 0
        %1811 = vmatprep.subr.bf16.mxu0 0
        %1812 = vmatpush1.bf16.msra.mxu0 0
        %1813 = vmatprep.subr.bf16.mxu0 0
        %1814 = vmatpush1.bf16.msra.mxu0 0
        %1815 = vmatprep.subr.bf16.mxu0 0
        %1816 = vmatpush1.bf16.msra.mxu0 0
        %1817 = vmatprep.subr.bf16.mxu0 0
        %1818 = vmatpush1.bf16.msra.mxu0 0
        %1819 = vmatprep.subr.bf16.mxu0 0
        %1820 = vmatpush1.bf16.msra.mxu0 0
        %1821 = vmatprep.subr.bf16.mxu0 0
        %1822 = vmatpush1.bf16.msra.mxu0 0
        %1823 = vmatprep.subr.bf16.mxu0 0
        %1824 = vmatpush1.bf16.msra.mxu0 0
        %1825 = vmatprep.subr.bf16.mxu0 0
        %1826 = vmatpush1.bf16.msra.mxu0 0
        %1827 = vmatprep.mubr.bf16.mxu0 0
        %1828 = vmatmul.mubr.bf16.gmra.mrb[0].mxu0 %v1793
        %v1829 = vpop.f32.mrb[0].mxu0
        %v1830 = vadd.f32 %v1779, %v1829
        %v1831 = vpop.f32.mrb[0].mxu0
        %v1832 = vpop.f32.mrb[0].mxu0
        %v1833 = vadd.f32 %v1779, %v1832
        %v1834 = vpop.f32.mrb[0].mxu0
        %1835 = vdwg.mxu0
        %v1836 = vadd.f32 %v626, %v1830
        %v1837 = vadd.f32 %v627, %v1833
        %v1838 = vsel %vm631, %v1836, 0.0
        %1839 = vadd.xlane.f32.xlu0 %v1838
        %v1840 = vpop.xlane.xlu0 %1839
        %v1841 = vsel %vm631, %v1837, 0.0
        %1842 = vadd.xlane.f32.xlu0 %v1841
        %v1843 = vpop.xlane.xlu0 %1842
        %v1844 = vmul.f32 %v1840, %v638
        %v1845 = vmul.f32 %v1843, %v638
        %v1846 = vsub.f32 %v1836, %v1844
        %v1847 = vsub.f32 %v1837, %v1845
        %v1848 = vmul.f32 %v1846, %v1846
        %v1849 = vmul.f32 %v1847, %v1847
        %v1850 = vsel %vm631, %v1848, 0.0
        %1851 = vadd.xlane.f32.xlu0 %v1850
        %v1852 = vpop.xlane.xlu0 %1851
        %v1853 = vsel %vm631, %v1849, 0.0
        %1854 = vadd.xlane.f32.xlu0 %v1853
        %v1855 = vpop.xlane.xlu0 %1854
        %v1856 = vmul.f32 %v1852, %v638
        %v1857 = vmul.f32 %v1855, %v638
        %v1858 = vadd.f32 %v1856, 1e-05
        %v1859 = vadd.f32 %v1857, 1e-05
        %v1860 = vrsqrt.pop %v1858
        %v1861 = vrsqrt.pop %v1859
        %v1862 = vmul.f32 %v1846, %v1860
        %v1863 = vmul.f32 %v1847, %v1861
        %v1864 = vlaneseq
        %v1865 = vshrl.u32 %v1864, 7
        %v1866 = vsub.s32 6, %v1865
        %v1867 = vrot.slane %v628, %v1866
        %v1868 = vmul.f32 %v1862, %v1867
        %v1869 = vmul.f32 %v1863, %v1867
        %v1870 = vlaneseq
        %v1871 = vshrl.u32 %v1870, 7
        %v1872 = vsub.s32 7, %v1871
        %v1873 = vrot.slane %v628, %v1872
        %v1874 = vadd.f32 %v1868, %v1873
        %v1875 = vadd.f32 %v1869, %v1873
        %v1876 = vpack.c.bf16 %v1875, %v1874
        %v1877 = vld [vmem:[%s543] sm:$0xf]
        %v1878 = vld [vmem:[%s543 + $0x4] sm:$0xf]
        %v1879 = vld [vmem:[%s543 + $0x8] sm:$0xf]
        %v1880 = vld [vmem:[%s543 + $0xc] sm:$0xf]
        %v1882 = vlaneseq
        %v1883 = vshrl.u32 %v1882, 7
        %v1884 = vsub.s32 0, %v1883
        %v1885 = vrot.slane %v630, %v1884
        %v1891 = vunpack.c.l.b16 %v1877
        %v1892 = vunpack.c.l.b16 %v1878
        %v1893 = vunpack.c.l.b16 %v1879
        %v1894 = vunpack.c.l.b16 %v1880
        %v1895 = vpack.c.b16 %v1892, %v1891
        %v1896 = vpack.c.b16 %v1894, %v1893
        %v1900 = vsel %vm631, %v1876, 0
        %1902 = vmatprep.subr.bf16.mxu0 0
        %1903 = vmatpush1.bf16.msra.mxu0 %v1895
        %1904 = vmatprep.subr.bf16.mxu0 0
        %1905 = vmatpush1.bf16.msra.mxu0 %v1896
        %1906 = vmatprep.subr.bf16.mxu0 0
        %1907 = vmatpush1.bf16.msra.mxu0 0
        %1908 = vmatprep.subr.bf16.mxu0 0
        %1909 = vmatpush1.bf16.msra.mxu0 0
        %1910 = vmatprep.subr.bf16.mxu0 0
        %1911 = vmatpush1.bf16.msra.mxu0 0
        %1912 = vmatprep.subr.bf16.mxu0 0
        %1913 = vmatpush1.bf16.msra.mxu0 0
        %1914 = vmatprep.subr.bf16.mxu0 0
        %1915 = vmatpush1.bf16.msra.mxu0 0
        %1916 = vmatprep.subr.bf16.mxu0 0
        %1917 = vmatpush1.bf16.msra.mxu0 0
        %1918 = vmatprep.subr.bf16.mxu0 0
        %1919 = vmatpush1.bf16.msra.mxu0 0
        %1920 = vmatprep.subr.bf16.mxu0 0
        %1921 = vmatpush1.bf16.msra.mxu0 0
        %1922 = vmatprep.subr.bf16.mxu0 0
        %1923 = vmatpush1.bf16.msra.mxu0 0
        %1924 = vmatprep.subr.bf16.mxu0 0
        %1925 = vmatpush1.bf16.msra.mxu0 0
        %1926 = vmatprep.subr.bf16.mxu0 0
        %1927 = vmatpush1.bf16.msra.mxu0 0
        %1928 = vmatprep.subr.bf16.mxu0 0
        %1929 = vmatpush1.bf16.msra.mxu0 0
        %1930 = vmatprep.subr.bf16.mxu0 0
        %1931 = vmatpush1.bf16.msra.mxu0 0
        %1932 = vmatprep.subr.bf16.mxu0 0
        %1933 = vmatpush1.bf16.msra.mxu0 0
        %1934 = vmatprep.mubr.bf16.mxu0 0
        %1935 = vmatmul.mubr.bf16.gmra.mrb[0].mxu0 %v1900
        %v1936 = vpop.f32.mrb[0].mxu0
        %v1937 = vadd.f32 %v1885, %v1936
        %v1938 = vpop.f32.mrb[0].mxu0
        %v1939 = vpop.f32.mrb[0].mxu0
        %v1940 = vadd.f32 %v1885, %v1939
        %v1941 = vpop.f32.mrb[0].mxu0
        %1942 = vdwg.mxu0
        %v1943 = vmul.f32 %v1937, %v1937
        %v1944 = vmul.f32 %v1940, %v1940
        %v1945 = vmul.f32 %v1937, %v1943
        %v1946 = vmul.f32 %v1940, %v1944
        %v1947 = vmul.f32 %v1945, 0.044715
        %v1948 = vmul.f32 %v1946, 0.044715
        %v1949 = vadd.f32 %v1937, %v1947
        %v1950 = vadd.f32 %v1940, %v1948
        %v1951 = vmul.f32 %v1949, 0.7978846
        %v1952 = vmul.f32 %v1950, 0.7978846
        %v1953 = vtanh.pop %v1951
        %v1954 = vtanh.pop %v1952
        %v1955 = vadd.f32 %v1953, 1.0
        %v1956 = vadd.f32 %v1954, 1.0
        %v1957 = vmul.f32 %v1955, 0.5
        %v1958 = vmul.f32 %v1956, 0.5
        %v1959 = vmul.f32 %v1937, %v1957
        %v1960 = vmul.f32 %v1940, %v1958
        %v1961 = vpack.c.bf16 %v1960, %v1959
        %v1962 = vld [vmem:[%s552] sm:$0xf]
        %v1963 = vld [vmem:[%s552 + $0x4] sm:$0xf]
        %v1964 = vld [vmem:[%s552 + $0x8] sm:$0xf]
        %v1965 = vld [vmem:[%s552 + $0xc] sm:$0xf]
        %v1966 = vld [vmem:[%s552 + $0x10] sm:$0xf]
        %v1967 = vld [vmem:[%s552 + $0x14] sm:$0xf]
        %v1968 = vld [vmem:[%s552 + $0x18] sm:$0xf]
        %v1969 = vld [vmem:[%s552 + $0x1c] sm:$0xf]
        %v1970 = vlaneseq
        %v1971 = vshrl.u32 %v1970, 7
        %v1972 = vsub.s32 0, %v1971
        %v1973 = vrot.slane %v629, %v1972
        %v1982 = vunpack.c.l.b16 %v1962
        %v1983 = vunpack.c.l.b16 %v1963
        %v1984 = vunpack.c.l.b16 %v1964
        %v1985 = vunpack.c.l.b16 %v1965
        %v1986 = vunpack.c.l.b16 %v1966
        %v1987 = vunpack.c.l.b16 %v1967
        %v1988 = vunpack.c.l.b16 %v1968
        %v1989 = vunpack.c.l.b16 %v1969
        %v1990 = vpack.c.b16 %v1983, %v1982
        %v1991 = vpack.c.b16 %v1985, %v1984
        %v1992 = vpack.c.b16 %v1987, %v1986
        %v1993 = vpack.c.b16 %v1989, %v1988
        %vm1998 = vcmask 523264
        %v2000 = vsel %vm1998, %v1961, 0
        %2002 = vmatprep.subr.bf16.mxu0 0
        %2003 = vmatpush1.bf16.msra.mxu0 %v1990
        %2004 = vmatprep.subr.bf16.mxu0 0
        %2005 = vmatpush1.bf16.msra.mxu0 %v1991
        %2006 = vmatprep.subr.bf16.mxu0 0
        %2007 = vmatpush1.bf16.msra.mxu0 %v1992
        %2008 = vmatprep.subr.bf16.mxu0 0
        %2009 = vmatpush1.bf16.msra.mxu0 %v1993
        %2010 = vmatprep.subr.bf16.mxu0 0
        %2011 = vmatpush1.bf16.msra.mxu0 0
        %2012 = vmatprep.subr.bf16.mxu0 0
        %2013 = vmatpush1.bf16.msra.mxu0 0
        %2014 = vmatprep.subr.bf16.mxu0 0
        %2015 = vmatpush1.bf16.msra.mxu0 0
        %2016 = vmatprep.subr.bf16.mxu0 0
        %2017 = vmatpush1.bf16.msra.mxu0 0
        %2018 = vmatprep.subr.bf16.mxu0 0
        %2019 = vmatpush1.bf16.msra.mxu0 0
        %2020 = vmatprep.subr.bf16.mxu0 0
        %2021 = vmatpush1.bf16.msra.mxu0 0
        %2022 = vmatprep.subr.bf16.mxu0 0
        %2023 = vmatpush1.bf16.msra.mxu0 0
        %2024 = vmatprep.subr.bf16.mxu0 0
        %2025 = vmatpush1.bf16.msra.mxu0 0
        %2026 = vmatprep.subr.bf16.mxu0 0
        %2027 = vmatpush1.bf16.msra.mxu0 0
        %2028 = vmatprep.subr.bf16.mxu0 0
        %2029 = vmatpush1.bf16.msra.mxu0 0
        %2030 = vmatprep.subr.bf16.mxu0 0
        %2031 = vmatpush1.bf16.msra.mxu0 0
        %2032 = vmatprep.subr.bf16.mxu0 0
        %2033 = vmatpush1.bf16.msra.mxu0 0
        %2034 = vmatprep.mubr.bf16.mxu0 0
        %2035 = vmatmul.mubr.bf16.gmra.mrb[0].mxu0 %v2000
        %v2036 = vpop.f32.mrb[0].mxu0
        %v2037 = vadd.f32 %v1973, %v2036
        %v2038 = vpop.f32.mrb[0].mxu0
        %v2039 = vpop.f32.mrb[0].mxu0
        %v2040 = vadd.f32 %v1973, %v2039
        %v2041 = vpop.f32.mrb[0].mxu0
        %2042 = vdwg.mxu0
        %v2043 = vadd.f32 %v1836, %v2037
        %v2044 = vadd.f32 %v1837, %v2040
        %2045 = vst.msk [vmem:[#allocation2] sm:$0xff] %vm631, %v2043
        %2046 = vst.msk [vmem:[#allocation2 + $0x8] sm:$0xff] %vm631, %v2044
        %p2047 = scmp.eq.s32.totalorder %s34, 1
        // Predicated region
        $region97: #{tpu_custom_call.1} parent=55 // pred_check
          %p2048 = pneg %p2047
        $region98: #{tpu_custom_call.1} parent=55 // pred_check_branch
          %2050 = sbr.rel (%p2048) target = $region100
        $region99: #{tpu_custom_call.1} parent=55 // pred_region
          %2051 = vst.msk [vmem:[#allocation18] sm:$0xff] %vm631, %v2043
          %2052 = vst.msk [vmem:[#allocation18 + $0x8] sm:$0xff] %vm631, %v2044
        $region100: #{tpu_custom_call.1} parent=55 // pred_fallthru
          _
        // Predicated region
        $region101: #{tpu_custom_call.1} parent=55 // pred_check
          %p2053 = pneg %p276
        $region102: #{tpu_custom_call.1} parent=55 // pred_check_branch
          %2055 = sbr.rel (%p2053) target = $region104
        $region103: #{tpu_custom_call.1} parent=55 // pred_region
          %s2057 = ssub.s32 256, 256
          %2058 = vsyncadd [#allocation5], %s2057
          %s2059 = sshll.u32 [#allocation18], 4
          %s2060 = int_to_ptr.vmem [resolvable:$true] %s2059
          %2065 = dma.vmem_to_hbm [thread:$0]  %s2060, 256, %s9, [#allocation5], 128, 128, 8
        $region104: #{tpu_custom_call.1} parent=55 // pred_fallthru
          _
        // Predicated region
        $region105: #{tpu_custom_call.1} parent=55 // pred_check
          %p2066 = pneg %p276
        $region106: #{tpu_custom_call.1} parent=55 // pred_check_branch
          %2068 = sbr.rel (%p2066) target = $region108
        $region107: #{tpu_custom_call.1} parent=55 // pred_region
          %2069 = dma.done [#allocation5], 256
        $region108: #{tpu_custom_call.1} parent=55 // pred_fallthru
          _
      $region56: #{tpu_custom_call.1} parent=5 // pred_fallthru
        _
      %p2070 = scmp.le.s32.totalorder 2, %s29
      // Predicated region
      $region109: #{tpu_custom_call.1} parent=5 // pred_check
        %p2071 = pneg %p2070
      $region110: #{tpu_custom_call.1} parent=5 // pred_check_branch
        %2073 = sbr.rel (%p2071) target = $region112
      $region111: #{tpu_custom_call.1} parent=5 // pred_region
        %s2074 = ssub.s32 %s29, 2
      $region112: #{tpu_custom_call.1} parent=5 // pred_fallthru
        _
    $region6: #{tpu_custom_call.1} parent=1 // loop_footer
      %s33 = sadd.s32 1, %s29
    $region7: #{tpu_custom_call.1} parent=1 // loop_footer_branch
      %28 = sbr.rel target = $region3
    $region8: #{tpu_custom_call.1} parent=1 // loop_exit
      _
    %2075 = vsyncpa [#allocation4], 1
    %s2076 = scalar_lea.sflag [#allocation4], 1
    %2077 = vsyncpa %s2076, 1
    %2078 = vsyncpa [#allocation7], 1
    %s2079 = scalar_lea.sflag [#allocation7], 1
    %2080 = vsyncpa %s2079, 1
    %2081 = vsyncpa [#allocation10], 1
    %s2082 = scalar_lea.sflag [#allocation10], 1
    %2083 = vsyncpa %s2082, 1
    %2084 = vsyncpa [#allocation13], 1
    %s2085 = scalar_lea.sflag [#allocation13], 1
    %2086 = vsyncpa %s2085, 1
    %2087 = vsyncpa [#allocation16], 1
    %s2088 = scalar_lea.sflag [#allocation16], 1
    %2089 = vsyncpa %s2088, 1
    %2090 = vsyncpa [#allocation5], 1
    %s2091 = scalar_lea.sflag [#allocation5], 1
    %2092 = vsyncpa %s2091, 1

</llo_original>
